<compile_context>
chip_gen: v7x
topology: tpu7x:2x2x1
jax: 0.10.0
libtpu: 0.0.40
codegen_flags: <defaults>
</compile_context>

<pallas_src>
import functools

import jax
import jax.numpy as jnp
from jax.experimental import pallas as pl
from jax.experimental.pallas import tpu as pltpu


# ----------------------------------------------------------------------------
# Kernel: processes BT batch elements per grid step, all math in (C, L) layout
# with L = H * Wgeom on the lane axis.
# ----------------------------------------------------------------------------
def _gated_residual_kernel(xv_ref, xh_ref, y_ref,
                           w_taps_ref, w_mix_ref, w_h2h_ref, bias_ref,
                           xv_out_ref, xh_out_ref,
                           *, bt, h, wgeom, k, p, cout, residual):
    co2 = 2 * cout
    L = h * wgeom
    # Only the non-masked taps (same ordering as the wrapper's weight stack).
    taps_v = [dy * wgeom + dx for dy in range(p) for dx in range(k)]
    taps_h = list(range(p + 1))
    n_v = len(taps_v)

    bias_v = bias_ref[:, 0:1]            # (Co2, 1)   bias of the v conv
    bias_h = bias_ref[:, 1:2]            # (Co2, 1)   bh + bv2h + 2*by (fused)
    w_v2h = w_mix_ref[:, :co2]           # (Co2, Co2)
    w_y2 = w_mix_ref[:, co2:]            # (Co2, Ccond) == 2 * wy

    for b in range(bt):
        xv_buf = xv_ref[b]                                  # (Cin, (H+p)*Wgeom)
        xh_buf = xh_ref[b]                                  # (Cin, (H+1)*Wgeom)
        y_buf = y_ref[b].astype(jnp.float32)                # (Ccond, L)

        # --- vertical-stack KxK conv (rows dy >= K//2 are masked -> skipped) --
        xv_conv = None
        for t, s in enumerate(taps_v):
            win = xv_buf[:, s:s + L].astype(jnp.float32)    # (Cin, L)
            part = jnp.dot(w_taps_ref[t], win,
                           preferred_element_type=jnp.float32)
            xv_conv = part if xv_conv is None else xv_conv + part
        if xv_conv is None:                                 # K == 1: all masked
            xv_conv = jnp.zeros((co2, L), jnp.float32)
        xv_conv = xv_conv + bias_v

        # --- horizontal-stack 1xK conv (cols dx > K//2 are masked -> skipped) -
        xh_center = xh_buf[:, p:p + L].astype(jnp.float32)  # tap dx == p, reused
        xh_pre = None
        for i, dx in enumerate(taps_h):
            win = xh_center if dx == p else xh_buf[:, dx:dx + L].astype(jnp.float32)
            part = jnp.dot(w_taps_ref[n_v + i], win,
                           preferred_element_type=jnp.float32)
            xh_pre = part if xh_pre is None else xh_pre + part

        # fused:  v2h(xv_conv) + 2*proj_y + (bh + bv2h + 2*by)
        xh_pre = xh_pre + jnp.dot(w_v2h, xv_conv, preferred_element_type=jnp.float32)
        xh_pre = xh_pre + jnp.dot(w_y2, y_buf, preferred_element_type=jnp.float32)
        xh_pre = xh_pre + bias_h

        # --- gates: tanh(a) * sigmoid(b), chunked along the channel axis ------
        xv_gated = jnp.tanh(xv_conv[:cout]) * jax.nn.sigmoid(xv_conv[cout:])
        xh_gated = jnp.tanh(xh_pre[:cout]) * jax.nn.sigmoid(xh_pre[cout:])

        # TODO(synk): nn.Dropout is stochastic in train mode; modeled as identity
        # (drop_rate=0 / eval semantics).

        xh_out = jnp.dot(w_h2h_ref[...], xh_gated,
                         preferred_element_type=jnp.float32)
        if residual:
            xh_out = xh_out + xh_center                     # original x_h slice

        xv_out_ref[b] = xv_gated.astype(xv_out_ref.dtype)
        xh_out_ref[b] = xh_out.astype(xh_out_ref.dtype)


def _pick_wgeom(h, w, p):
    """Smallest padded row width >= W + 2p (within +8) making H*Wgeom % 128 == 0."""
    base = w + 2 * p
    for cand in range(base, base + 9):
        if (h * cand) % 128 == 0:
            return cand
    return base


# ----------------------------------------------------------------------------
# Wrapper: repack weights, build the lane-dense flattened/padded buffers,
# call pallas_call, and slice the valid columns back out.
# ----------------------------------------------------------------------------
def gated_residual_block(x_v, x_h, y, params, *, kernel_size):
    wv, bv, wh, bh, wv2h, bv2h, wh2h, wy, by = params
    B, Cin, H, W = x_v.shape
    Ccond = y.shape[1]
    K = kernel_size
    p = K // 2
    Cout = wh2h.shape[0]
    residual = (Cin == Cout)

    # apply_mask(): the PyTorch forward re-zeroes the masked taps on every call,
    # so re-apply here to guarantee the tap-skipping invariant.
    wv = wv.at[:, :, p:, :].set(0.0)
    wh = wh.at[:, :, :, p + 1:].set(0.0)

    # Repacked weights: only non-masked taps, one stacked tap tensor, one fused
    # mix matrix (v2h | 2*wy), fused biases.
    taps_v = [(dy, dx) for dy in range(p) for dx in range(K)]
    taps_h = list(range(p + 1))
    tap_mats = ([wv[:, :, dy, dx] for (dy, dx) in taps_v]
                + [wh[:, :, 0, dx] for dx in taps_h])
    w_taps = jnp.stack(tap_mats, axis=0)                         # (T, Co2, Cin)
    w_mix = jnp.concatenate([wv2h[:, :, 0, 0], 2.0 * wy[:, :, 0, 0]], axis=1)
    w_h2h = wh2h[:, :, 0, 0]                                     # (Cout, Cout)
    bias_all = jnp.stack([bv, bh + bv2h + 2.0 * by], axis=1)     # (Co2, 2)

    # Common padded-row geometry so every conv tap is a contiguous lane slice.
    Wgeom = _pick_wgeom(H, W, p)
    L = H * Wgeom

    xv_pad = jnp.pad(x_v, ((0, 0), (0, 0), (p, 0), (p, Wgeom - W - p)))
    xv_flat = xv_pad.reshape(B, Cin, (H + p) * Wgeom)
    xh_pad = jnp.pad(x_h, ((0, 0), (0, 0), (0, 1), (p, Wgeom - W - p)))
    xh_flat = xh_pad.reshape(B, Cin, (H + 1) * Wgeom)
    y_pad = jnp.pad(y, ((0, 0), (0, 0), (0, 0), (0, Wgeom - W)))
    y_flat = y_pad.reshape(B, Ccond, L)

    # Batch tile: as many images per grid step as possible (amortizes the
    # ~0.35us per-step pipeline overhead); grid axis stays "parallel".
    BT = 1
    for cand in range(min(B, 8), 0, -1):
        if B % cand == 0:
            BT = cand
            break

    kernel = functools.partial(
        _gated_residual_kernel, bt=BT, h=H, wgeom=Wgeom, k=K, p=p,
        cout=Cout, residual=residual)

    def batch_spec(c, n):
        return pl.BlockSpec((BT, c, n), lambda b: (b, 0, 0))

    def full_spec(shape):
        nd = len(shape)
        return pl.BlockSpec(shape, lambda b, _nd=nd: (0,) * _nd)

    grid_spec = pltpu.PrefetchScalarGridSpec(
        num_scalar_prefetch=0,
        grid=(B // BT,),
        in_specs=[
            batch_spec(Cin, (H + p) * Wgeom),
            batch_spec(Cin, (H + 1) * Wgeom),
            batch_spec(Ccond, L),
            full_spec(w_taps.shape),
            full_spec(w_mix.shape),
            full_spec(w_h2h.shape),
            full_spec(bias_all.shape),
        ],
        out_specs=[
            batch_spec(Cout, L),
            batch_spec(Cout, L),
        ],
    )

    out_shapes = (jax.ShapeDtypeStruct((B, Cout, L), x_v.dtype),
                  jax.ShapeDtypeStruct((B, Cout, L), x_v.dtype))

    xv_flat_out, xh_flat_out = pl.pallas_call(
        kernel,
        grid_spec=grid_spec,
        out_shape=out_shapes,
        compiler_params=pltpu.CompilerParams(
            dimension_semantics=("parallel",)),
    )(xv_flat, xh_flat, y_flat, w_taps, w_mix, w_h2h, bias_all)

    # Outputs are lane-dense in padded-column geometry; slicing the valid
    # columns back out is pure layout plumbing done once outside the kernel.
    xv_out = xv_flat_out.reshape(B, Cout, H, Wgeom)[:, :, :, :W]
    xh_out = xh_flat_out.reshape(B, Cout, H, Wgeom)[:, :, :, :W]
    return xv_out, xh_out


# ----------------------------------------------------------------------------
# Deterministic parameter init with PyTorch-style (OIHW / per-channel) shapes.
# ----------------------------------------------------------------------------
def init_params(key, in_channels, out_channels, kernel_size, n_cond_channels):
    K = kernel_size
    Co2 = 2 * out_channels
    ks = jax.random.split(key, 9)
    s = 0.1
    wv = s * jax.random.normal(ks[0], (Co2, in_channels, K, K), jnp.float32)
    bv = s * jax.random.normal(ks[1], (Co2,), jnp.float32)
    wh = s * jax.random.normal(ks[2], (Co2, in_channels, 1, K), jnp.float32)
    bh = s * jax.random.normal(ks[3], (Co2,), jnp.float32)
    wv2h = s * jax.random.normal(ks[4], (Co2, Co2, 1, 1), jnp.float32)
    bv2h = s * jax.random.normal(ks[5], (Co2,), jnp.float32)
    wh2h = s * jax.random.normal(ks[6], (out_channels, out_channels, 1, 1), jnp.float32)
    wy = s * jax.random.normal(ks[7], (Co2, n_cond_channels, 1, 1), jnp.float32)
    by = s * jax.random.normal(ks[8], (Co2,), jnp.float32)
    return (wv, bv, wh, bh, wv2h, bv2h, wh2h, wy, by)


# ----------------------------------------------------------------------------
# Pure-JAX reference (NCHW) mirroring the PyTorch forward, for validation.
# ----------------------------------------------------------------------------
def _conv_nchw(x, w, b, padding):
    out = jax.lax.conv_general_dilated(
        x, w, window_strides=(1, 1), padding=padding,
        dimension_numbers=('NCHW', 'OIHW', 'NCHW'),
        precision=jax.lax.Precision.HIGHEST)
    if b is not None:
        out = out + b.reshape(1, -1, 1, 1)
    return out


def _gate(x):
    c = x.shape[1] // 2
    return jnp.tanh(x[:, :c]) * jax.nn.sigmoid(x[:, c:])


def reference_forward(x_v, x_h, y, params, *, kernel_size):
    wv, bv, wh, bh, wv2h, bv2h, wh2h, wy, by = params
    K = kernel_size
    p = K // 2
    wv = wv.at[:, :, p:, :].set(0.0)        # apply_mask()
    wh = wh.at[:, :, :, p + 1:].set(0.0)
    proj_y = _conv_nchw(y, wy, by, [(0, 0), (0, 0)])
    x_v_out = _conv_nchw(x_v, wv, bv, [(p, p), (p, p)])
    x_v2h = _conv_nchw(x_v_out, wv2h, bv2h, [(0, 0), (0, 0)]) + proj_y
    x_v_gated = _gate(x_v_out)
    x_h_out = _conv_nchw(x_h, wh, bh, [(0, 0), (p, p)]) + x_v2h + proj_y
    x_h_out = _gate(x_h_out)
    x_h_out = _conv_nchw(x_h_out, wh2h, None, [(0, 0), (0, 0)])
    if x_v.shape[1] == wh2h.shape[0]:
        x_h_out = x_h_out + x_h
    return x_v_gated, x_h_out


if __name__ == "__main__":
    B, C, H, W = 2, 4, 16, 16
    K = 3
    CCOND = 4

    key = jax.random.PRNGKey(0)
    k1, k2, k3, kp = jax.random.split(key, 4)
    x_v = jax.random.normal(k1, (B, C, H, W), jnp.float32)
    x_h = jax.random.normal(k2, (B, C, H, W), jnp.float32)
    y = jax.random.normal(k3, (B, CCOND, H, W), jnp.float32)

    params = init_params(kp, in_channels=C, out_channels=C,
                         kernel_size=K, n_cond_channels=CCOND)

    xv_out, xh_out = gated_residual_block(x_v, x_h, y, params, kernel_size=K)
    jax.block_until_ready((xv_out, xh_out))

    xv_ref, xh_ref = reference_forward(x_v, x_h, y, params, kernel_size=K)
    assert xv_out.shape == (B, C, H, W) and xh_out.shape == (B, C, H, W)
    assert jnp.allclose(xv_out, xv_ref, atol=2e-3, rtol=2e-3), "x_v_out mismatch"
    assert jnp.allclose(xh_out, xh_ref, atol=2e-3, rtol=2e-3), "x_h_out mismatch"

    print("KERNEL_OK")
</pallas_src>

<mosaic_0001>
module attributes {stable_mosaic.version = 11 : i64} {
  func.func @_gated_residual_kernel(%arg0: i32, %arg1: memref<2x4x408xf32, #tpu.memory_space<vmem>>, %arg2: memref<2x4x408xf32, #tpu.memory_space<vmem>>, %arg3: memref<2x4x384xf32, #tpu.memory_space<vmem>>, %arg4: memref<5x8x4xf32, #tpu.memory_space<vmem>>, %arg5: memref<8x12xf32, #tpu.memory_space<vmem>>, %arg6: memref<4x4xf32, #tpu.memory_space<vmem>>, %arg7: memref<8x2xf32, #tpu.memory_space<vmem>>, %arg8: memref<2x4x384xf32, #tpu.memory_space<vmem>>, %arg9: memref<2x4x384xf32, #tpu.memory_space<vmem>>) attributes {dimension_semantics = [#tpu.dimension_semantics<parallel>], iteration_bounds = array<i64: 1>, scalar_prefetch = 0 : i64, scratch_operands = 0 : i64, tpu.core_type = #tpu.core_type<tc>, window_params = [{transform_indices = @transform_0, window_bounds = array<i64: 2, 4, 408>}, {transform_indices = @transform_1, window_bounds = array<i64: 2, 4, 408>}, {transform_indices = @transform_2, window_bounds = array<i64: 2, 4, 384>}, {pipeline_mode = #tpu.pipeline_mode<synchronous>, transform_indices = @transform_3, window_bounds = array<i64: 5, 8, 4>}, {pipeline_mode = #tpu.pipeline_mode<synchronous>, transform_indices = @transform_4, window_bounds = array<i64: 8, 12>}, {pipeline_mode = #tpu.pipeline_mode<synchronous>, transform_indices = @transform_5, window_bounds = array<i64: 4, 4>}, {pipeline_mode = #tpu.pipeline_mode<synchronous>, transform_indices = @transform_6, window_bounds = array<i64: 8, 2>}, {transform_indices = @transform_7, window_bounds = array<i64: 2, 4, 384>}, {transform_indices = @transform_8, window_bounds = array<i64: 2, 4, 384>}]} {
    %c0 = arith.constant 0 : index
    %c0_0 = arith.constant 0 : index
    %0 = vector.load %arg7[%c0, %c0_0] : memref<8x2xf32, #tpu.memory_space<vmem>>, vector<8x1xf32>
    %c0_1 = arith.constant 0 : index
    %c1 = arith.constant 1 : index
    %1 = vector.load %arg7[%c0_1, %c1] : memref<8x2xf32, #tpu.memory_space<vmem>>, vector<8x1xf32>
    %c0_2 = arith.constant 0 : index
    %c0_3 = arith.constant 0 : index
    %2 = vector.load %arg5[%c0_2, %c0_3] : memref<8x12xf32, #tpu.memory_space<vmem>>, vector<8x8xf32>
    %c0_4 = arith.constant 0 : index
    %c8 = arith.constant 8 : index
    %3 = vector.load %arg5[%c0_4, %c8] : memref<8x12xf32, #tpu.memory_space<vmem>>, vector<8x4xf32>
    %c0_5 = arith.constant 0 : index
    %c0_6 = arith.constant 0 : index
    %c0_7 = arith.constant 0 : index
    %4 = vector.load %arg1[%c0_5, %c0_6, %c0_7] : memref<2x4x408xf32, #tpu.memory_space<vmem>>, vector<1x4x408xf32>
    %5 = vector.shape_cast %4 : vector<1x4x408xf32> to vector<4x408xf32>
    %c0_8 = arith.constant 0 : index
    %c0_9 = arith.constant 0 : index
    %c0_10 = arith.constant 0 : index
    %6 = vector.load %arg2[%c0_8, %c0_9, %c0_10] : memref<2x4x408xf32, #tpu.memory_space<vmem>>, vector<1x4x408xf32>
    %7 = vector.shape_cast %6 : vector<1x4x408xf32> to vector<4x408xf32>
    %c0_11 = arith.constant 0 : index
    %c0_12 = arith.constant 0 : index
    %c0_13 = arith.constant 0 : index
    %8 = vector.load %arg3[%c0_11, %c0_12, %c0_13] : memref<2x4x384xf32, #tpu.memory_space<vmem>>, vector<1x4x384xf32>
    %9 = vector.shape_cast %8 : vector<1x4x384xf32> to vector<4x384xf32>
    %10 = vector.extract_strided_slice %5 {offsets = [0, 0], sizes = [4, 384], strides = [1, 1]} : vector<4x408xf32> to vector<4x384xf32>
    %c0_14 = arith.constant 0 : index
    %c0_15 = arith.constant 0 : index
    %c0_16 = arith.constant 0 : index
    %11 = vector.load %arg4[%c0_14, %c0_15, %c0_16] : memref<5x8x4xf32, #tpu.memory_space<vmem>>, vector<1x8x4xf32>
    %12 = vector.shape_cast %11 : vector<1x8x4xf32> to vector<8x4xf32>
    %cst = arith.constant dense<0.000000e+00> : vector<8x384xf32>
    %13 = tpu.matmul %12, %10, %cst {dimension_numbers = #tpu.dot_dimension_numbers<[1], [0], [0], [1], [0, 0, 1, 1], [], []>} : vector<8x4xf32>, vector<4x384xf32>, vector<8x384xf32> -> vector<8x384xf32>
    %14 = vector.extract_strided_slice %5 {offsets = [0, 1], sizes = [4, 384], strides = [1, 1]} : vector<4x408xf32> to vector<4x384xf32>
    %c1_17 = arith.constant 1 : index
    %c0_18 = arith.constant 0 : index
    %c0_19 = arith.constant 0 : index
    %15 = vector.load %arg4[%c1_17, %c0_18, %c0_19] : memref<5x8x4xf32, #tpu.memory_space<vmem>>, vector<1x8x4xf32>
    %16 = vector.shape_cast %15 : vector<1x8x4xf32> to vector<8x4xf32>
    %cst_20 = arith.constant dense<0.000000e+00> : vector<8x384xf32>
    %17 = tpu.matmul %16, %14, %cst_20 {dimension_numbers = #tpu.dot_dimension_numbers<[1], [0], [0], [1], [0, 0, 1, 1], [], []>} : vector<8x4xf32>, vector<4x384xf32>, vector<8x384xf32> -> vector<8x384xf32>
    %18 = arith.addf %13, %17 : vector<8x384xf32>
    %19 = vector.extract_strided_slice %5 {offsets = [0, 2], sizes = [4, 384], strides = [1, 1]} : vector<4x408xf32> to vector<4x384xf32>
    %c2 = arith.constant 2 : index
    %c0_21 = arith.constant 0 : index
    %c0_22 = arith.constant 0 : index
    %20 = vector.load %arg4[%c2, %c0_21, %c0_22] : memref<5x8x4xf32, #tpu.memory_space<vmem>>, vector<1x8x4xf32>
    %21 = vector.shape_cast %20 : vector<1x8x4xf32> to vector<8x4xf32>
    %cst_23 = arith.constant dense<0.000000e+00> : vector<8x384xf32>
    %22 = tpu.matmul %21, %19, %cst_23 {dimension_numbers = #tpu.dot_dimension_numbers<[1], [0], [0], [1], [0, 0, 1, 1], [], []>} : vector<8x4xf32>, vector<4x384xf32>, vector<8x384xf32> -> vector<8x384xf32>
    %23 = arith.addf %18, %22 : vector<8x384xf32>
    %24 = vector.broadcast %0 : vector<8x1xf32> to vector<8x384xf32>
    %25 = arith.addf %23, %24 : vector<8x384xf32>
    %26 = vector.extract_strided_slice %7 {offsets = [0, 1], sizes = [4, 384], strides = [1, 1]} : vector<4x408xf32> to vector<4x384xf32>
    %27 = vector.extract_strided_slice %7 {offsets = [0, 0], sizes = [4, 384], strides = [1, 1]} : vector<4x408xf32> to vector<4x384xf32>
    %c3 = arith.constant 3 : index
    %c0_24 = arith.constant 0 : index
    %c0_25 = arith.constant 0 : index
    %28 = vector.load %arg4[%c3, %c0_24, %c0_25] : memref<5x8x4xf32, #tpu.memory_space<vmem>>, vector<1x8x4xf32>
    %29 = vector.shape_cast %28 : vector<1x8x4xf32> to vector<8x4xf32>
    %cst_26 = arith.constant dense<0.000000e+00> : vector<8x384xf32>
    %30 = tpu.matmul %29, %27, %cst_26 {dimension_numbers = #tpu.dot_dimension_numbers<[1], [0], [0], [1], [0, 0, 1, 1], [], []>} : vector<8x4xf32>, vector<4x384xf32>, vector<8x384xf32> -> vector<8x384xf32>
    %c4 = arith.constant 4 : index
    %c0_27 = arith.constant 0 : index
    %c0_28 = arith.constant 0 : index
    %31 = vector.load %arg4[%c4, %c0_27, %c0_28] : memref<5x8x4xf32, #tpu.memory_space<vmem>>, vector<1x8x4xf32>
    %32 = vector.shape_cast %31 : vector<1x8x4xf32> to vector<8x4xf32>
    %cst_29 = arith.constant dense<0.000000e+00> : vector<8x384xf32>
    %33 = tpu.matmul %32, %26, %cst_29 {dimension_numbers = #tpu.dot_dimension_numbers<[1], [0], [0], [1], [0, 0, 1, 1], [], []>} : vector<8x4xf32>, vector<4x384xf32>, vector<8x384xf32> -> vector<8x384xf32>
    %34 = arith.addf %30, %33 : vector<8x384xf32>
    %cst_30 = arith.constant dense<0.000000e+00> : vector<8x384xf32>
    %35 = tpu.matmul %2, %25, %cst_30 {dimension_numbers = #tpu.dot_dimension_numbers<[1], [0], [0], [1], [0, 0, 1, 1], [], []>} : vector<8x8xf32>, vector<8x384xf32>, vector<8x384xf32> -> vector<8x384xf32>
    %36 = arith.addf %34, %35 : vector<8x384xf32>
    %cst_31 = arith.constant dense<0.000000e+00> : vector<8x384xf32>
    %37 = tpu.matmul %3, %9, %cst_31 {dimension_numbers = #tpu.dot_dimension_numbers<[1], [0], [0], [1], [0, 0, 1, 1], [], []>} : vector<8x4xf32>, vector<4x384xf32>, vector<8x384xf32> -> vector<8x384xf32>
    %38 = arith.addf %36, %37 : vector<8x384xf32>
    %39 = vector.broadcast %1 : vector<8x1xf32> to vector<8x384xf32>
    %40 = arith.addf %38, %39 : vector<8x384xf32>
    %41 = vector.extract_strided_slice %25 {offsets = [0, 0], sizes = [4, 384], strides = [1, 1]} : vector<8x384xf32> to vector<4x384xf32>
    %42 = math.tanh %41 : vector<4x384xf32>
    %43 = vector.extract_strided_slice %25 {offsets = [4, 0], sizes = [4, 384], strides = [1, 1]} : vector<8x384xf32> to vector<4x384xf32>
    %44 = arith.negf %43 : vector<4x384xf32>
    %45 = math.exp %44 : vector<4x384xf32>
    %cst_32 = arith.constant 1.000000e+00 : f32
    %46 = vector.broadcast %cst_32 : f32 to vector<4x384xf32>
    %47 = arith.addf %46, %45 : vector<4x384xf32>
    %48 = arith.divf %46, %47 : vector<4x384xf32>
    %49 = arith.mulf %42, %48 : vector<4x384xf32>
    %50 = vector.extract_strided_slice %40 {offsets = [0, 0], sizes = [4, 384], strides = [1, 1]} : vector<8x384xf32> to vector<4x384xf32>
    %51 = math.tanh %50 : vector<4x384xf32>
    %52 = vector.extract_strided_slice %40 {offsets = [4, 0], sizes = [4, 384], strides = [1, 1]} : vector<8x384xf32> to vector<4x384xf32>
    %53 = arith.negf %52 : vector<4x384xf32>
    %54 = math.exp %53 : vector<4x384xf32>
    %cst_33 = arith.constant 1.000000e+00 : f32
    %55 = vector.broadcast %cst_33 : f32 to vector<4x384xf32>
    %56 = arith.addf %55, %54 : vector<4x384xf32>
    %57 = arith.divf %55, %56 : vector<4x384xf32>
    %58 = arith.mulf %51, %57 : vector<4x384xf32>
    %c0_34 = arith.constant 0 : index
    %c0_35 = arith.constant 0 : index
    %59 = vector.load %arg6[%c0_34, %c0_35] : memref<4x4xf32, #tpu.memory_space<vmem>>, vector<4x4xf32>
    %cst_36 = arith.constant dense<0.000000e+00> : vector<4x384xf32>
    %60 = tpu.matmul %59, %58, %cst_36 {dimension_numbers = #tpu.dot_dimension_numbers<[1], [0], [0], [1], [0, 0, 1, 1], [], []>} : vector<4x4xf32>, vector<4x384xf32>, vector<4x384xf32> -> vector<4x384xf32>
    %61 = arith.addf %60, %26 : vector<4x384xf32>
    %c0_37 = arith.constant 0 : index
    %c0_38 = arith.constant 0 : index
    %c0_39 = arith.constant 0 : index
    %62 = vector.load %arg8[%c0_37, %c0_38, %c0_39] : memref<2x4x384xf32, #tpu.memory_space<vmem>>, vector<1x4x384xf32>
    %63 = vector.shape_cast %62 : vector<1x4x384xf32> to vector<4x384xf32>
    %64 = vector.shape_cast %49 : vector<4x384xf32> to vector<1x4x384xf32>
    tpu.vector_store %arg8[%c0_37, %c0_38, %c0_39], %64 {strides = array<i32>} : memref<2x4x384xf32, #tpu.memory_space<vmem>>, vector<1x4x384xf32>,
    %c0_40 = arith.constant 0 : index
    %c0_41 = arith.constant 0 : index
    %c0_42 = arith.constant 0 : index
    %65 = vector.load %arg9[%c0_40, %c0_41, %c0_42] : memref<2x4x384xf32, #tpu.memory_space<vmem>>, vector<1x4x384xf32>
    %66 = vector.shape_cast %65 : vector<1x4x384xf32> to vector<4x384xf32>
    %67 = vector.shape_cast %61 : vector<4x384xf32> to vector<1x4x384xf32>
    tpu.vector_store %arg9[%c0_40, %c0_41, %c0_42], %67 {strides = array<i32>} : memref<2x4x384xf32, #tpu.memory_space<vmem>>, vector<1x4x384xf32>,
    %c1_43 = arith.constant 1 : index
    %c0_44 = arith.constant 0 : index
    %c0_45 = arith.constant 0 : index
    %68 = vector.load %arg1[%c1_43, %c0_44, %c0_45] : memref<2x4x408xf32, #tpu.memory_space<vmem>>, vector<1x4x408xf32>
    %69 = vector.shape_cast %68 : vector<1x4x408xf32> to vector<4x408xf32>
    %c1_46 = arith.constant 1 : index
    %c0_47 = arith.constant 0 : index
    %c0_48 = arith.constant 0 : index
    %70 = vector.load %arg2[%c1_46, %c0_47, %c0_48] : memref<2x4x408xf32, #tpu.memory_space<vmem>>, vector<1x4x408xf32>
    %71 = vector.shape_cast %70 : vector<1x4x408xf32> to vector<4x408xf32>
    %c1_49 = arith.constant 1 : index
    %c0_50 = arith.constant 0 : index
    %c0_51 = arith.constant 0 : index
    %72 = vector.load %arg3[%c1_49, %c0_50, %c0_51] : memref<2x4x384xf32, #tpu.memory_space<vmem>>, vector<1x4x384xf32>
    %73 = vector.shape_cast %72 : vector<1x4x384xf32> to vector<4x384xf32>
    %74 = vector.extract_strided_slice %69 {offsets = [0, 0], sizes = [4, 384], strides = [1, 1]} : vector<4x408xf32> to vector<4x384xf32>
    %c0_52 = arith.constant 0 : index
    %c0_53 = arith.constant 0 : index
    %c0_54 = arith.constant 0 : index
    %75 = vector.load %arg4[%c0_52, %c0_53, %c0_54] : memref<5x8x4xf32, #tpu.memory_space<vmem>>, vector<1x8x4xf32>
    %76 = vector.shape_cast %75 : vector<1x8x4xf32> to vector<8x4xf32>
    %cst_55 = arith.constant dense<0.000000e+00> : vector<8x384xf32>
    %77 = tpu.matmul %76, %74, %cst_55 {dimension_numbers = #tpu.dot_dimension_numbers<[1], [0], [0], [1], [0, 0, 1, 1], [], []>} : vector<8x4xf32>, vector<4x384xf32>, vector<8x384xf32> -> vector<8x384xf32>
    %78 = vector.extract_strided_slice %69 {offsets = [0, 1], sizes = [4, 384], strides = [1, 1]} : vector<4x408xf32> to vector<4x384xf32>
    %c1_56 = arith.constant 1 : index
    %c0_57 = arith.constant 0 : index
    %c0_58 = arith.constant 0 : index
    %79 = vector.load %arg4[%c1_56, %c0_57, %c0_58] : memref<5x8x4xf32, #tpu.memory_space<vmem>>, vector<1x8x4xf32>
    %80 = vector.shape_cast %79 : vector<1x8x4xf32> to vector<8x4xf32>
    %cst_59 = arith.constant dense<0.000000e+00> : vector<8x384xf32>
    %81 = tpu.matmul %80, %78, %cst_59 {dimension_numbers = #tpu.dot_dimension_numbers<[1], [0], [0], [1], [0, 0, 1, 1], [], []>} : vector<8x4xf32>, vector<4x384xf32>, vector<8x384xf32> -> vector<8x384xf32>
    %82 = arith.addf %77, %81 : vector<8x384xf32>
    %83 = vector.extract_strided_slice %69 {offsets = [0, 2], sizes = [4, 384], strides = [1, 1]} : vector<4x408xf32> to vector<4x384xf32>
    %c2_60 = arith.constant 2 : index
    %c0_61 = arith.constant 0 : index
    %c0_62 = arith.constant 0 : index
    %84 = vector.load %arg4[%c2_60, %c0_61, %c0_62] : memref<5x8x4xf32, #tpu.memory_space<vmem>>, vector<1x8x4xf32>
    %85 = vector.shape_cast %84 : vector<1x8x4xf32> to vector<8x4xf32>
    %cst_63 = arith.constant dense<0.000000e+00> : vector<8x384xf32>
    %86 = tpu.matmul %85, %83, %cst_63 {dimension_numbers = #tpu.dot_dimension_numbers<[1], [0], [0], [1], [0, 0, 1, 1], [], []>} : vector<8x4xf32>, vector<4x384xf32>, vector<8x384xf32> -> vector<8x384xf32>
    %87 = arith.addf %82, %86 : vector<8x384xf32>
    %88 = vector.broadcast %0 : vector<8x1xf32> to vector<8x384xf32>
    %89 = arith.addf %87, %88 : vector<8x384xf32>
    %90 = vector.extract_strided_slice %71 {offsets = [0, 1], sizes = [4, 384], strides = [1, 1]} : vector<4x408xf32> to vector<4x384xf32>
    %91 = vector.extract_strided_slice %71 {offsets = [0, 0], sizes = [4, 384], strides = [1, 1]} : vector<4x408xf32> to vector<4x384xf32>
    %c3_64 = arith.constant 3 : index
    %c0_65 = arith.constant 0 : index
    %c0_66 = arith.constant 0 : index
    %92 = vector.load %arg4[%c3_64, %c0_65, %c0_66] : memref<5x8x4xf32, #tpu.memory_space<vmem>>, vector<1x8x4xf32>
    %93 = vector.shape_cast %92 : vector<1x8x4xf32> to vector<8x4xf32>
    %cst_67 = arith.constant dense<0.000000e+00> : vector<8x384xf32>
    %94 = tpu.matmul %93, %91, %cst_67 {dimension_numbers = #tpu.dot_dimension_numbers<[1], [0], [0], [1], [0, 0, 1, 1], [], []>} : vector<8x4xf32>, vector<4x384xf32>, vector<8x384xf32> -> vector<8x384xf32>
    %c4_68 = arith.constant 4 : index
    %c0_69 = arith.constant 0 : index
    %c0_70 = arith.constant 0 : index
    %95 = vector.load %arg4[%c4_68, %c0_69, %c0_70] : memref<5x8x4xf32, #tpu.memory_space<vmem>>, vector<1x8x4xf32>
    %96 = vector.shape_cast %95 : vector<1x8x4xf32> to vector<8x4xf32>
    %cst_71 = arith.constant dense<0.000000e+00> : vector<8x384xf32>
    %97 = tpu.matmul %96, %90, %cst_71 {dimension_numbers = #tpu.dot_dimension_numbers<[1], [0], [0], [1], [0, 0, 1, 1], [], []>} : vector<8x4xf32>, vector<4x384xf32>, vector<8x384xf32> -> vector<8x384xf32>
    %98 = arith.addf %94, %97 : vector<8x384xf32>
    %cst_72 = arith.constant dense<0.000000e+00> : vector<8x384xf32>
    %99 = tpu.matmul %2, %89, %cst_72 {dimension_numbers = #tpu.dot_dimension_numbers<[1], [0], [0], [1], [0, 0, 1, 1], [], []>} : vector<8x8xf32>, vector<8x384xf32>, vector<8x384xf32> -> vector<8x384xf32>
    %100 = arith.addf %98, %99 : vector<8x384xf32>
    %cst_73 = arith.constant dense<0.000000e+00> : vector<8x384xf32>
    %101 = tpu.matmul %3, %73, %cst_73 {dimension_numbers = #tpu.dot_dimension_numbers<[1], [0], [0], [1], [0, 0, 1, 1], [], []>} : vector<8x4xf32>, vector<4x384xf32>, vector<8x384xf32> -> vector<8x384xf32>
    %102 = arith.addf %100, %101 : vector<8x384xf32>
    %103 = vector.broadcast %1 : vector<8x1xf32> to vector<8x384xf32>
    %104 = arith.addf %102, %103 : vector<8x384xf32>
    %105 = vector.extract_strided_slice %89 {offsets = [0, 0], sizes = [4, 384], strides = [1, 1]} : vector<8x384xf32> to vector<4x384xf32>
    %106 = math.tanh %105 : vector<4x384xf32>
    %107 = vector.extract_strided_slice %89 {offsets = [4, 0], sizes = [4, 384], strides = [1, 1]} : vector<8x384xf32> to vector<4x384xf32>
    %108 = arith.negf %107 : vector<4x384xf32>
    %109 = math.exp %108 : vector<4x384xf32>
    %cst_74 = arith.constant 1.000000e+00 : f32
    %110 = vector.broadcast %cst_74 : f32 to vector<4x384xf32>
    %111 = arith.addf %110, %109 : vector<4x384xf32>
    %112 = arith.divf %110, %111 : vector<4x384xf32>
    %113 = arith.mulf %106, %112 : vector<4x384xf32>
    %114 = vector.extract_strided_slice %104 {offsets = [0, 0], sizes = [4, 384], strides = [1, 1]} : vector<8x384xf32> to vector<4x384xf32>
    %115 = math.tanh %114 : vector<4x384xf32>
    %116 = vector.extract_strided_slice %104 {offsets = [4, 0], sizes = [4, 384], strides = [1, 1]} : vector<8x384xf32> to vector<4x384xf32>
    %117 = arith.negf %116 : vector<4x384xf32>
    %118 = math.exp %117 : vector<4x384xf32>
    %cst_75 = arith.constant 1.000000e+00 : f32
    %119 = vector.broadcast %cst_75 : f32 to vector<4x384xf32>
    %120 = arith.addf %119, %118 : vector<4x384xf32>
    %121 = arith.divf %119, %120 : vector<4x384xf32>
    %122 = arith.mulf %115, %121 : vector<4x384xf32>
    %c0_76 = arith.constant 0 : index
    %c0_77 = arith.constant 0 : index
    %123 = vector.load %arg6[%c0_76, %c0_77] : memref<4x4xf32, #tpu.memory_space<vmem>>, vector<4x4xf32>
    %cst_78 = arith.constant dense<0.000000e+00> : vector<4x384xf32>
    %124 = tpu.matmul %123, %122, %cst_78 {dimension_numbers = #tpu.dot_dimension_numbers<[1], [0], [0], [1], [0, 0, 1, 1], [], []>} : vector<4x4xf32>, vector<4x384xf32>, vector<4x384xf32> -> vector<4x384xf32>
    %125 = arith.addf %124, %90 : vector<4x384xf32>
    %c1_79 = arith.constant 1 : index
    %c0_80 = arith.constant 0 : index
    %c0_81 = arith.constant 0 : index
    %126 = vector.load %arg8[%c1_79, %c0_80, %c0_81] : memref<2x4x384xf32, #tpu.memory_space<vmem>>, vector<1x4x384xf32>
    %127 = vector.shape_cast %126 : vector<1x4x384xf32> to vector<4x384xf32>
    %128 = vector.shape_cast %113 : vector<4x384xf32> to vector<1x4x384xf32>
    tpu.vector_store %arg8[%c1_79, %c0_80, %c0_81], %128 {strides = array<i32>} : memref<2x4x384xf32, #tpu.memory_space<vmem>>, vector<1x4x384xf32>,
    %c1_82 = arith.constant 1 : index
    %c0_83 = arith.constant 0 : index
    %c0_84 = arith.constant 0 : index
    %129 = vector.load %arg9[%c1_82, %c0_83, %c0_84] : memref<2x4x384xf32, #tpu.memory_space<vmem>>, vector<1x4x384xf32>
    %130 = vector.shape_cast %129 : vector<1x4x384xf32> to vector<4x384xf32>
    %131 = vector.shape_cast %125 : vector<4x384xf32> to vector<1x4x384xf32>
    tpu.vector_store %arg9[%c1_82, %c0_83, %c0_84], %131 {strides = array<i32>} : memref<2x4x384xf32, #tpu.memory_space<vmem>>, vector<1x4x384xf32>,
    return
  }
  func.func @transform_0(%arg0: i32) -> (i32, i32, i32) {
    %c0_i32 = arith.constant 0 : i32
    %c0_i32_0 = arith.constant 0 : i32
    %c0_i32_1 = arith.constant 0 : i32
    return %arg0, %c0_i32, %c0_i32_0 : i32, i32, i32
  }
  func.func @transform_1(%arg0: i32) -> (i32, i32, i32) {
    %c0_i32 = arith.constant 0 : i32
    %c0_i32_0 = arith.constant 0 : i32
    %c0_i32_1 = arith.constant 0 : i32
    return %arg0, %c0_i32, %c0_i32_0 : i32, i32, i32
  }
  func.func @transform_2(%arg0: i32) -> (i32, i32, i32) {
    %c0_i32 = arith.constant 0 : i32
    %c0_i32_0 = arith.constant 0 : i32
    %c0_i32_1 = arith.constant 0 : i32
    return %arg0, %c0_i32, %c0_i32_0 : i32, i32, i32
  }
  func.func @transform_3(%arg0: i32) -> (i32, i32, i32) {
    %c0_i32 = arith.constant 0 : i32
    %c0_i32_0 = arith.constant 0 : i32
    %c0_i32_1 = arith.constant 0 : i32
    %c0_i32_2 = arith.constant 0 : i32
    return %c0_i32, %c0_i32_0, %c0_i32_1 : i32, i32, i32
  }
  func.func @transform_4(%arg0: i32) -> (i32, i32) {
    %c0_i32 = arith.constant 0 : i32
    %c0_i32_0 = arith.constant 0 : i32
    %c0_i32_1 = arith.constant 0 : i32
    return %c0_i32, %c0_i32_0 : i32, i32
  }
  func.func @transform_5(%arg0: i32) -> (i32, i32) {
    %c0_i32 = arith.constant 0 : i32
    %c0_i32_0 = arith.constant 0 : i32
    %c0_i32_1 = arith.constant 0 : i32
    return %c0_i32, %c0_i32_0 : i32, i32
  }
  func.func @transform_6(%arg0: i32) -> (i32, i32) {
    %c0_i32 = arith.constant 0 : i32
    %c0_i32_0 = arith.constant 0 : i32
    %c0_i32_1 = arith.constant 0 : i32
    return %c0_i32, %c0_i32_0 : i32, i32
  }
  func.func @transform_7(%arg0: i32) -> (i32, i32, i32) {
    %c0_i32 = arith.constant 0 : i32
    %c0_i32_0 = arith.constant 0 : i32
    %c0_i32_1 = arith.constant 0 : i32
    return %arg0, %c0_i32, %c0_i32_0 : i32, i32, i32
  }
  func.func @transform_8(%arg0: i32) -> (i32, i32, i32) {
    %c0_i32 = arith.constant 0 : i32
    %c0_i32_0 = arith.constant 0 : i32
    %c0_i32_1 = arith.constant 0 : i32
    return %arg0, %c0_i32, %c0_i32_0 : i32, i32, i32
  }
}

</mosaic_0001>

<llo_original>
// kernel: tpu_custom_call.1
$region0: #{tpu_custom_call.1}
  #allocation0 [shape = 'u32[]', space=smem, size = 0x4, offset = 0x4, fixed_abs, tag = 'smem constant byte address 0x4 - core index']
  #allocation1 [shape = 'u32[144,128]{1,0:T(1,128)}', space=vmem, size = 0x12000, scoped, tag = 'internal scratch']
  %s0 = inlined_call_operand.vmem [shape: f32[2,4,408], index: 0, kind: input, shape index: {}]
  %s1 = inlined_call_operand.vmem [shape: f32[2,4,408], index: 1, kind: input, shape index: {}]
  %s2 = inlined_call_operand.hbm [shape: f32[2,4,384], index: 2, kind: input, shape index: {}]
  %s3 = inlined_call_operand.vmem [shape: f32[5,8,4], index: 3, kind: input, shape index: {}]
  %s4 = inlined_call_operand.vmem [shape: f32[8,12], index: 4, kind: input, shape index: {}]
  %s5 = inlined_call_operand.vmem [shape: f32[4,4], index: 5, kind: input, shape index: {}]
  %s6 = inlined_call_operand.vmem [shape: f32[8,2], index: 6, kind: input, shape index: {}]
  %s7 = inlined_call_operand.hbm [shape: f32[2,4,384], index: 7, kind: output, shape index: {0}]
  %s8 = inlined_call_operand.hbm [shape: f32[2,4,384], index: 8, kind: output, shape index: {1}]
  %9 = xla_tuple %s7, %s8
  %s10 = sld [smem:[#allocation0]]
  $region50: #{tpu_custom_call.1} parent=0
    _
  %s12 = ssub.s32 1, %s10
  %s13 = scalar_select 0, %s12, %s10
  $region1: #{tpu_custom_call.1} parent=0
    #allocation2 [shape = 'u8[12288]{0}', space=vmem, size = 0x3000, scoped, tag = 'input window, operand 2, single buffered']
    #allocation3 [shape = 's32[1]{0}', space=sflag, size = 0x4, scoped, tag = 'scoped memory for tpu_custom_call.1']
    #allocation4 [shape = 's32[1]{0}', space=sflag, size = 0x4, scoped, tag = 'scoped memory for tpu_custom_call.1']
    #allocation5 [shape = 'u8[12288]{0}', space=vmem, size = 0x3000, scoped, tag = 'output window, operand 0, single buffered']
    #allocation6 [shape = 'u8[12288]{0}', space=vmem, size = 0x3000, scoped, tag = 'output window, operand 1, single buffered']
    #allocation7 [shape = 's32[1]{0}', space=sflag, size = 0x4, scoped, tag = 'scoped memory for tpu_custom_call.1']
    %14 = vsyncpa [#allocation3], 0
    %15 = vsyncpa [#allocation4], 0
    %16 = vsyncpa [#allocation7], 0
    // Predicated region
    $region2: #{tpu_custom_call.1} parent=1 // pred_check
      _
    $region3: #{tpu_custom_call.1} parent=1 // pred_check_branch
      %18 = sbr.rel (0) target = $region5
    $region4: #{tpu_custom_call.1} parent=1 // pred_region
      _
    $region5: #{tpu_custom_call.1} parent=1 // pred_fallthru
      _
    // Predicated region
    $region6: #{tpu_custom_call.1} parent=1 // pred_check
      _
    $region7: #{tpu_custom_call.1} parent=1 // pred_check_branch
      %20 = sbr.rel (0) target = $region9
    $region8: #{tpu_custom_call.1} parent=1 // pred_region
      _
    $region9: #{tpu_custom_call.1} parent=1 // pred_fallthru
      _
    // Predicated region
    $region10: #{tpu_custom_call.1} parent=1 // pred_check
      _
    $region11: #{tpu_custom_call.1} parent=1 // pred_check_branch
      %22 = sbr.rel (0) target = $region13
    $region12: #{tpu_custom_call.1} parent=1 // pred_region
      %s24 = ssub.s32 384, 384
      %25 = vsyncadd [#allocation3], %s24
      %s26 = sshll.u32 [#allocation2], 4
      %s27 = int_to_ptr.vmem [resolvable:$true] %s26
      %32 = dma.hbm_to_vmem [thread:$0]  %s2, 384, %s27, [#allocation3], 192, 192, 12
    $region13: #{tpu_custom_call.1} parent=1 // pred_fallthru
      _
    // Predicated region
    $region14: #{tpu_custom_call.1} parent=1 // pred_check
      _
    $region15: #{tpu_custom_call.1} parent=1 // pred_check_branch
      %34 = sbr.rel (0) target = $region17
    $region16: #{tpu_custom_call.1} parent=1 // pred_region
      _
    $region17: #{tpu_custom_call.1} parent=1 // pred_fallthru
      _
    // Predicated region
    $region18: #{tpu_custom_call.1} parent=1 // pred_check
      _
    $region19: #{tpu_custom_call.1} parent=1 // pred_check_branch
      %36 = sbr.rel (0) target = $region21
    $region20: #{tpu_custom_call.1} parent=1 // pred_region
      _
    $region21: #{tpu_custom_call.1} parent=1 // pred_fallthru
      _
    // Predicated region
    $region22: #{tpu_custom_call.1} parent=1 // pred_check
      _
    $region23: #{tpu_custom_call.1} parent=1 // pred_check_branch
      %38 = sbr.rel (0) target = $region25
    $region24: #{tpu_custom_call.1} parent=1 // pred_region
      _
    $region25: #{tpu_custom_call.1} parent=1 // pred_fallthru
      _
    // Predicated region
    $region26: #{tpu_custom_call.1} parent=1 // pred_check
      _
    $region27: #{tpu_custom_call.1} parent=1 // pred_check_branch
      %40 = sbr.rel (0) target = $region29
    $region28: #{tpu_custom_call.1} parent=1 // pred_region
      _
    $region29: #{tpu_custom_call.1} parent=1 // pred_fallthru
      _
    // Predicated region
    $region30: #{tpu_custom_call.1} parent=1 // pred_check
      _
    $region31: #{tpu_custom_call.1} parent=1 // pred_check_branch
      %42 = sbr.rel (0) target = $region33
    $region32: #{tpu_custom_call.1} parent=1 // pred_region
      %43 = dma.done [#allocation3], 384
    $region33: #{tpu_custom_call.1} parent=1 // pred_fallthru
      _
    %v44 = vld [vmem:[%s6] sm:$0xff]
    %v45 = vld [vmem:[%s4] sm:$0xff]
    %v46 = vld [vmem:[%s0] sm:$0xff]
    %v47 = vld [vmem:[%s0 + $0x8] sm:$0xff]
    %v48 = vld [vmem:[%s1] sm:$0xff]
    %v49 = vld [vmem:[%s1 + $0x8] sm:$0xff]
    %v50 = vld [vmem:[#allocation2] sm:$0xff]
    %v51 = vld [vmem:[#allocation2 + $0x8] sm:$0xf]
    %v52 = vld [vmem:[%s3] sm:$0xff]
    %s53 = scalar_lea.vmem %s3, 8
    %v54 = vld [vmem:[%s53] sm:$0xff]
    %v57 = vcombine.high %v46, %v46
    %v58 = vcombine.high %v47, %v47
    %59 = vrot.lane.b32.xlu0 %v46, 127
    %v60 = vpop.permute.xlu0 %59
    %61 = vrot.lane.b32.xlu0 %v57, 127
    %v62 = vpop.permute.xlu0 %61
    %63 = vrot.lane.b32.xlu0 %v47, 127
    %v64 = vpop.permute.xlu0 %63
    %65 = vrot.lane.b32.xlu0 %v58, 127
    %v66 = vpop.permute.xlu0 %65
    %vm67 = vcmask 1039360
    %v68 = vsel %vm67, %v60, %v62
    %v69 = vsel %vm67, %v62, %v64
    %v70 = vsel %vm67, %v64, %v66
    %vm71 = vcmask 31744
    %v73 = vsel %vm71, %v54, 0
    %vm75 = vcmask 1043456
    %v76 = vsel %vm75, %v68, 0
    %v78 = vsel %vm75, %v69, 0
    %v80 = vsel %vm75, %v70, 0
    %82 = vmatprep.subr.mxu0 %v78
    %83 = vmatpush1.msra.mxu0 %v76
    %84 = vmatprep.subr.mxu0 0.0
    %85 = vmatpush1.msra.mxu0 0.0
    %86 = vmatprep.subr.mxu0 0.0
    %87 = vmatpush1.msra.mxu0 0.0
    %88 = vmatprep.subr.mxu0 0.0
    %89 = vmatpush1.msra.mxu0 0.0
    %90 = vmatprep.subr.mxu0 0.0
    %91 = vmatpush1.msra.mxu0 0.0
    %92 = vmatprep.subr.mxu0 0.0
    %93 = vmatpush1.msra.mxu0 0.0
    %94 = vmatprep.subr.mxu0 0.0
    %95 = vmatpush1.msra.mxu0 0.0
    %96 = vmatprep.subr.mxu0 0.0
    %97 = vmatpush1.msra.mxu0 0.0
    %98 = vmatprep.subr.mxu0 0.0
    %99 = vmatpush1.msra.mxu0 0.0
    %100 = vmatprep.subr.mxu0 0.0
    %101 = vmatpush1.msra.mxu0 0.0
    %102 = vmatprep.subr.mxu0 0.0
    %103 = vmatpush1.msra.mxu0 0.0
    %104 = vmatprep.subr.mxu0 0.0
    %105 = vmatpush1.msra.mxu0 0.0
    %106 = vmatprep.subr.mxu0 0.0
    %107 = vmatpush1.msra.mxu0 0.0
    %108 = vmatprep.subr.mxu0 0.0
    %109 = vmatpush1.msra.mxu0 0.0
    %110 = vmatprep.subr.mxu0 0.0
    %111 = vmatpush1.msra.mxu0 0.0
    %112 = vmatprep.subr.mxu0 0.0
    %113 = vmatpush1.msra.mxu0 0.0
    %114 = vmatprep.subr.mxu0 0.0
    %115 = vmatpush1.msra.mxu0 0.0
    %116 = vmatprep.subr.mxu0 0.0
    %117 = vmatpush1.msra.mxu0 0.0
    %118 = vmatprep.subr.mxu0 0.0
    %119 = vmatpush1.msra.mxu0 0.0
    %120 = vmatprep.subr.mxu0 0.0
    %121 = vmatpush1.msra.mxu0 0.0
    %122 = vmatprep.subr.mxu0 0.0
    %123 = vmatpush1.msra.mxu0 0.0
    %124 = vmatprep.subr.mxu0 0.0
    %125 = vmatpush1.msra.mxu0 0.0
    %126 = vmatprep.subr.mxu0 0.0
    %127 = vmatpush1.msra.mxu0 0.0
    %128 = vmatprep.subr.mxu0 0.0
    %129 = vmatpush1.msra.mxu0 0.0
    %130 = vmatprep.subr.mxu0 0.0
    %131 = vmatpush1.msra.mxu0 0.0
    %132 = vmatprep.subr.mxu0 0.0
    %133 = vmatpush1.msra.mxu0 0.0
    %134 = vmatprep.subr.mxu0 0.0
    %135 = vmatpush1.msra.mxu0 0.0
    %136 = vmatprep.subr.mxu0 0.0
    %137 = vmatpush1.msra.mxu0 0.0
    %138 = vmatprep.subr.mxu0 0.0
    %139 = vmatpush1.msra.mxu0 0.0
    %140 = vmatprep.subr.mxu0 0.0
    %141 = vmatpush1.msra.mxu0 0.0
    %142 = vmatprep.subr.mxu0 0.0
    %143 = vmatpush1.msra.mxu0 0.0
    %144 = vmatprep.subr.mxu0 0.0
    %145 = vmatpush1.msra.mxu0 0.0
    %146 = vmatprep.mubr.f32.mxu0 0.0
    %147 = vmatmul.mubr.f32.gmra.mrb[0].mxu0 %v73
    %v148 = vpop.f32.mrb[0].mxu0
    %v149 = vadd.f32 0.0, %v148
    %v150 = vpop.f32.mrb[0].mxu0
    %v151 = vadd.f32 0.0, %v150
    %152 = vdwg.mxu0
    %153 = vmatprep.subr.mxu0 0.0
    %154 = vmatpush1.msra.mxu0 %v80
    %155 = vmatprep.subr.mxu0 0.0
    %156 = vmatpush1.msra.mxu0 0.0
    %157 = vmatprep.subr.mxu0 0.0
    %158 = vmatpush1.msra.mxu0 0.0
    %159 = vmatprep.subr.mxu0 0.0
    %160 = vmatpush1.msra.mxu0 0.0
    %161 = vmatprep.subr.mxu0 0.0
    %162 = vmatpush1.msra.mxu0 0.0
    %163 = vmatprep.subr.mxu0 0.0
    %164 = vmatpush1.msra.mxu0 0.0
    %165 = vmatprep.subr.mxu0 0.0
    %166 = vmatpush1.msra.mxu0 0.0
    %167 = vmatprep.subr.mxu0 0.0
    %168 = vmatpush1.msra.mxu0 0.0
    %169 = vmatprep.subr.mxu0 0.0
    %170 = vmatpush1.msra.mxu0 0.0
    %171 = vmatprep.subr.mxu0 0.0
    %172 = vmatpush1.msra.mxu0 0.0
    %173 = vmatprep.subr.mxu0 0.0
    %174 = vmatpush1.msra.mxu0 0.0
    %175 = vmatprep.subr.mxu0 0.0
    %176 = vmatpush1.msra.mxu0 0.0
    %177 = vmatprep.subr.mxu0 0.0
    %178 = vmatpush1.msra.mxu0 0.0
    %179 = vmatprep.subr.mxu0 0.0
    %180 = vmatpush1.msra.mxu0 0.0
    %181 = vmatprep.subr.mxu0 0.0
    %182 = vmatpush1.msra.mxu0 0.0
    %183 = vmatprep.subr.mxu0 0.0
    %184 = vmatpush1.msra.mxu0 0.0
    %185 = vmatprep.subr.mxu0 0.0
    %186 = vmatpush1.msra.mxu0 0.0
    %187 = vmatprep.subr.mxu0 0.0
    %188 = vmatpush1.msra.mxu0 0.0
    %189 = vmatprep.subr.mxu0 0.0
    %190 = vmatpush1.msra.mxu0 0.0
    %191 = vmatprep.subr.mxu0 0.0
    %192 = vmatpush1.msra.mxu0 0.0
    %193 = vmatprep.subr.mxu0 0.0
    %194 = vmatpush1.msra.mxu0 0.0
    %195 = vmatprep.subr.mxu0 0.0
    %196 = vmatpush1.msra.mxu0 0.0
    %197 = vmatprep.subr.mxu0 0.0
    %198 = vmatpush1.msra.mxu0 0.0
    %199 = vmatprep.subr.mxu0 0.0
    %200 = vmatpush1.msra.mxu0 0.0
    %201 = vmatprep.subr.mxu0 0.0
    %202 = vmatpush1.msra.mxu0 0.0
    %203 = vmatprep.subr.mxu0 0.0
    %204 = vmatpush1.msra.mxu0 0.0
    %205 = vmatprep.subr.mxu0 0.0
    %206 = vmatpush1.msra.mxu0 0.0
    %207 = vmatprep.subr.mxu0 0.0
    %208 = vmatpush1.msra.mxu0 0.0
    %209 = vmatprep.subr.mxu0 0.0
    %210 = vmatpush1.msra.mxu0 0.0
    %211 = vmatprep.subr.mxu0 0.0
    %212 = vmatpush1.msra.mxu0 0.0
    %213 = vmatprep.subr.mxu0 0.0
    %214 = vmatpush1.msra.mxu0 0.0
    %215 = vmatprep.subr.mxu0 0.0
    %216 = vmatpush1.msra.mxu0 0.0
    %217 = vmatprep.mubr.f32.mxu0 0.0
    %218 = vmatmul.mubr.f32.gmra.mrb[0].mxu0 %v73
    %v219 = vpop.f32.mrb[0].mxu0
    %v220 = vadd.f32 0.0, %v219
    %v221 = vpop.f32.mrb[0].mxu0
    %222 = vdwg.mxu0
    %v224 = vsel %vm71, %v52, 0
    %v226 = vsel %vm75, %v46, 0
    %v228 = vsel %vm75, %v57, 0
    %v230 = vsel %vm75, %v47, 0
    %232 = vmatprep.subr.mxu0 %v228
    %233 = vmatpush1.msra.mxu0 %v226
    %234 = vmatprep.subr.mxu0 0.0
    %235 = vmatpush1.msra.mxu0 0.0
    %236 = vmatprep.subr.mxu0 0.0
    %237 = vmatpush1.msra.mxu0 0.0
    %238 = vmatprep.subr.mxu0 0.0
    %239 = vmatpush1.msra.mxu0 0.0
    %240 = vmatprep.subr.mxu0 0.0
    %241 = vmatpush1.msra.mxu0 0.0
    %242 = vmatprep.subr.mxu0 0.0
    %243 = vmatpush1.msra.mxu0 0.0
    %244 = vmatprep.subr.mxu0 0.0
    %245 = vmatpush1.msra.mxu0 0.0
    %246 = vmatprep.subr.mxu0 0.0
    %247 = vmatpush1.msra.mxu0 0.0
    %248 = vmatprep.subr.mxu0 0.0
    %249 = vmatpush1.msra.mxu0 0.0
    %250 = vmatprep.subr.mxu0 0.0
    %251 = vmatpush1.msra.mxu0 0.0
    %252 = vmatprep.subr.mxu0 0.0
    %253 = vmatpush1.msra.mxu0 0.0
    %254 = vmatprep.subr.mxu0 0.0
    %255 = vmatpush1.msra.mxu0 0.0
    %256 = vmatprep.subr.mxu0 0.0
    %257 = vmatpush1.msra.mxu0 0.0
    %258 = vmatprep.subr.mxu0 0.0
    %259 = vmatpush1.msra.mxu0 0.0
    %260 = vmatprep.subr.mxu0 0.0
    %261 = vmatpush1.msra.mxu0 0.0
    %262 = vmatprep.subr.mxu0 0.0
    %263 = vmatpush1.msra.mxu0 0.0
    %264 = vmatprep.subr.mxu0 0.0
    %265 = vmatpush1.msra.mxu0 0.0
    %266 = vmatprep.subr.mxu0 0.0
    %267 = vmatpush1.msra.mxu0 0.0
    %268 = vmatprep.subr.mxu0 0.0
    %269 = vmatpush1.msra.mxu0 0.0
    %270 = vmatprep.subr.mxu0 0.0
    %271 = vmatpush1.msra.mxu0 0.0
    %272 = vmatprep.subr.mxu0 0.0
    %273 = vmatpush1.msra.mxu0 0.0
    %274 = vmatprep.subr.mxu0 0.0
    %275 = vmatpush1.msra.mxu0 0.0
    %276 = vmatprep.subr.mxu0 0.0
    %277 = vmatpush1.msra.mxu0 0.0
    %278 = vmatprep.subr.mxu0 0.0
    %279 = vmatpush1.msra.mxu0 0.0
    %280 = vmatprep.subr.mxu0 0.0
    %281 = vmatpush1.msra.mxu0 0.0
    %282 = vmatprep.subr.mxu0 0.0
    %283 = vmatpush1.msra.mxu0 0.0
    %284 = vmatprep.subr.mxu0 0.0
    %285 = vmatpush1.msra.mxu0 0.0
    %286 = vmatprep.subr.mxu0 0.0
    %287 = vmatpush1.msra.mxu0 0.0
    %288 = vmatprep.subr.mxu0 0.0
    %289 = vmatpush1.msra.mxu0 0.0
    %290 = vmatprep.subr.mxu0 0.0
    %291 = vmatpush1.msra.mxu0 0.0
    %292 = vmatprep.subr.mxu0 0.0
    %293 = vmatpush1.msra.mxu0 0.0
    %294 = vmatprep.subr.mxu0 0.0
    %295 = vmatpush1.msra.mxu0 0.0
    %296 = vmatprep.mubr.f32.mxu0 0.0
    %297 = vmatmul.mubr.f32.gmra.mrb[0].mxu0 %v224
    %v298 = vpop.f32.mrb[0].mxu0
    %v299 = vadd.f32 %v149, %v298
    %v300 = vpop.f32.mrb[0].mxu0
    %v301 = vadd.f32 %v151, %v300
    %302 = vdwg.mxu0
    %303 = vmatprep.subr.mxu0 0.0
    %304 = vmatpush1.msra.mxu0 %v230
    %305 = vmatprep.subr.mxu0 0.0
    %306 = vmatpush1.msra.mxu0 0.0
    %307 = vmatprep.subr.mxu0 0.0
    %308 = vmatpush1.msra.mxu0 0.0
    %309 = vmatprep.subr.mxu0 0.0
    %310 = vmatpush1.msra.mxu0 0.0
    %311 = vmatprep.subr.mxu0 0.0
    %312 = vmatpush1.msra.mxu0 0.0
    %313 = vmatprep.subr.mxu0 0.0
    %314 = vmatpush1.msra.mxu0 0.0
    %315 = vmatprep.subr.mxu0 0.0
    %316 = vmatpush1.msra.mxu0 0.0
    %317 = vmatprep.subr.mxu0 0.0
    %318 = vmatpush1.msra.mxu0 0.0
    %319 = vmatprep.subr.mxu0 0.0
    %320 = vmatpush1.msra.mxu0 0.0
    %321 = vmatprep.subr.mxu0 0.0
    %322 = vmatpush1.msra.mxu0 0.0
    %323 = vmatprep.subr.mxu0 0.0
    %324 = vmatpush1.msra.mxu0 0.0
    %325 = vmatprep.subr.mxu0 0.0
    %326 = vmatpush1.msra.mxu0 0.0
    %327 = vmatprep.subr.mxu0 0.0
    %328 = vmatpush1.msra.mxu0 0.0
    %329 = vmatprep.subr.mxu0 0.0
    %330 = vmatpush1.msra.mxu0 0.0
    %331 = vmatprep.subr.mxu0 0.0
    %332 = vmatpush1.msra.mxu0 0.0
    %333 = vmatprep.subr.mxu0 0.0
    %334 = vmatpush1.msra.mxu0 0.0
    %335 = vmatprep.subr.mxu0 0.0
    %336 = vmatpush1.msra.mxu0 0.0
    %337 = vmatprep.subr.mxu0 0.0
    %338 = vmatpush1.msra.mxu0 0.0
    %339 = vmatprep.subr.mxu0 0.0
    %340 = vmatpush1.msra.mxu0 0.0
    %341 = vmatprep.subr.mxu0 0.0
    %342 = vmatpush1.msra.mxu0 0.0
    %343 = vmatprep.subr.mxu0 0.0
    %344 = vmatpush1.msra.mxu0 0.0
    %345 = vmatprep.subr.mxu0 0.0
    %346 = vmatpush1.msra.mxu0 0.0
    %347 = vmatprep.subr.mxu0 0.0
    %348 = vmatpush1.msra.mxu0 0.0
    %349 = vmatprep.subr.mxu0 0.0
    %350 = vmatpush1.msra.mxu0 0.0
    %351 = vmatprep.subr.mxu0 0.0
    %352 = vmatpush1.msra.mxu0 0.0
    %353 = vmatprep.subr.mxu0 0.0
    %354 = vmatpush1.msra.mxu0 0.0
    %355 = vmatprep.subr.mxu0 0.0
    %356 = vmatpush1.msra.mxu0 0.0
    %357 = vmatprep.subr.mxu0 0.0
    %358 = vmatpush1.msra.mxu0 0.0
    %359 = vmatprep.subr.mxu0 0.0
    %360 = vmatpush1.msra.mxu0 0.0
    %361 = vmatprep.subr.mxu0 0.0
    %362 = vmatpush1.msra.mxu0 0.0
    %363 = vmatprep.subr.mxu0 0.0
    %364 = vmatpush1.msra.mxu0 0.0
    %365 = vmatprep.subr.mxu0 0.0
    %366 = vmatpush1.msra.mxu0 0.0
    %367 = vmatprep.mubr.f32.mxu0 0.0
    %368 = vmatmul.mubr.f32.gmra.mrb[0].mxu0 %v224
    %v369 = vpop.f32.mrb[0].mxu0
    %v370 = vadd.f32 %v220, %v369
    %v371 = vpop.f32.mrb[0].mxu0
    %372 = vdwg.mxu0
    %s373 = scalar_lea.vmem %s3, 16
    %v374 = vld [vmem:[%s373] sm:$0xff]
    %375 = vrot.lane.b32.xlu0 %v46, 126
    %v376 = vpop.permute.xlu0 %375
    %377 = vrot.lane.b32.xlu0 %v57, 126
    %v378 = vpop.permute.xlu0 %377
    %379 = vrot.lane.b32.xlu0 %v47, 126
    %v380 = vpop.permute.xlu0 %379
    %381 = vrot.lane.b32.xlu0 %v58, 126
    %v382 = vpop.permute.xlu0 %381
    %vm383 = vcmask 1031168
    %v384 = vsel %vm383, %v376, %v378
    %v385 = vsel %vm383, %v378, %v380
    %v386 = vsel %vm383, %v380, %v382
    %v388 = vsel %vm71, %v374, 0
    %v390 = vsel %vm75, %v384, 0
    %v392 = vsel %vm75, %v385, 0
    %v394 = vsel %vm75, %v386, 0
    %396 = vmatprep.subr.mxu0 %v392
    %397 = vmatpush1.msra.mxu0 %v390
    %398 = vmatprep.subr.mxu0 0.0
    %399 = vmatpush1.msra.mxu0 0.0
    %400 = vmatprep.subr.mxu0 0.0
    %401 = vmatpush1.msra.mxu0 0.0
    %402 = vmatprep.subr.mxu0 0.0
    %403 = vmatpush1.msra.mxu0 0.0
    %404 = vmatprep.subr.mxu0 0.0
    %405 = vmatpush1.msra.mxu0 0.0
    %406 = vmatprep.subr.mxu0 0.0
    %407 = vmatpush1.msra.mxu0 0.0
    %408 = vmatprep.subr.mxu0 0.0
    %409 = vmatpush1.msra.mxu0 0.0
    %410 = vmatprep.subr.mxu0 0.0
    %411 = vmatpush1.msra.mxu0 0.0
    %412 = vmatprep.subr.mxu0 0.0
    %413 = vmatpush1.msra.mxu0 0.0
    %414 = vmatprep.subr.mxu0 0.0
    %415 = vmatpush1.msra.mxu0 0.0
    %416 = vmatprep.subr.mxu0 0.0
    %417 = vmatpush1.msra.mxu0 0.0
    %418 = vmatprep.subr.mxu0 0.0
    %419 = vmatpush1.msra.mxu0 0.0
    %420 = vmatprep.subr.mxu0 0.0
    %421 = vmatpush1.msra.mxu0 0.0
    %422 = vmatprep.subr.mxu0 0.0
    %423 = vmatpush1.msra.mxu0 0.0
    %424 = vmatprep.subr.mxu0 0.0
    %425 = vmatpush1.msra.mxu0 0.0
    %426 = vmatprep.subr.mxu0 0.0
    %427 = vmatpush1.msra.mxu0 0.0
    %428 = vmatprep.subr.mxu0 0.0
    %429 = vmatpush1.msra.mxu0 0.0
    %430 = vmatprep.subr.mxu0 0.0
    %431 = vmatpush1.msra.mxu0 0.0
    %432 = vmatprep.subr.mxu0 0.0
    %433 = vmatpush1.msra.mxu0 0.0
    %434 = vmatprep.subr.mxu0 0.0
    %435 = vmatpush1.msra.mxu0 0.0
    %436 = vmatprep.subr.mxu0 0.0
    %437 = vmatpush1.msra.mxu0 0.0
    %438 = vmatprep.subr.mxu0 0.0
    %439 = vmatpush1.msra.mxu0 0.0
    %440 = vmatprep.subr.mxu0 0.0
    %441 = vmatpush1.msra.mxu0 0.0
    %442 = vmatprep.subr.mxu0 0.0
    %443 = vmatpush1.msra.mxu0 0.0
    %444 = vmatprep.subr.mxu0 0.0
    %445 = vmatpush1.msra.mxu0 0.0
    %446 = vmatprep.subr.mxu0 0.0
    %447 = vmatpush1.msra.mxu0 0.0
    %448 = vmatprep.subr.mxu0 0.0
    %449 = vmatpush1.msra.mxu0 0.0
    %450 = vmatprep.subr.mxu0 0.0
    %451 = vmatpush1.msra.mxu0 0.0
    %452 = vmatprep.subr.mxu0 0.0
    %453 = vmatpush1.msra.mxu0 0.0
    %454 = vmatprep.subr.mxu0 0.0
    %455 = vmatpush1.msra.mxu0 0.0
    %456 = vmatprep.subr.mxu0 0.0
    %457 = vmatpush1.msra.mxu0 0.0
    %458 = vmatprep.subr.mxu0 0.0
    %459 = vmatpush1.msra.mxu0 0.0
    %460 = vmatprep.mubr.f32.mxu0 0.0
    %461 = vmatmul.mubr.f32.gmra.mrb[0].mxu0 %v388
    %v462 = vpop.f32.mrb[0].mxu0
    %v463 = vadd.f32 0.0, %v462
    %v464 = vpop.f32.mrb[0].mxu0
    %v465 = vadd.f32 0.0, %v464
    %466 = vdwg.mxu0
    %467 = vmatprep.subr.mxu0 0.0
    %468 = vmatpush1.msra.mxu0 %v394
    %469 = vmatprep.subr.mxu0 0.0
    %470 = vmatpush1.msra.mxu0 0.0
    %471 = vmatprep.subr.mxu0 0.0
    %472 = vmatpush1.msra.mxu0 0.0
    %473 = vmatprep.subr.mxu0 0.0
    %474 = vmatpush1.msra.mxu0 0.0
    %475 = vmatprep.subr.mxu0 0.0
    %476 = vmatpush1.msra.mxu0 0.0
    %477 = vmatprep.subr.mxu0 0.0
    %478 = vmatpush1.msra.mxu0 0.0
    %479 = vmatprep.subr.mxu0 0.0
    %480 = vmatpush1.msra.mxu0 0.0
    %481 = vmatprep.subr.mxu0 0.0
    %482 = vmatpush1.msra.mxu0 0.0
    %483 = vmatprep.subr.mxu0 0.0
    %484 = vmatpush1.msra.mxu0 0.0
    %485 = vmatprep.subr.mxu0 0.0
    %486 = vmatpush1.msra.mxu0 0.0
    %487 = vmatprep.subr.mxu0 0.0
    %488 = vmatpush1.msra.mxu0 0.0
    %489 = vmatprep.subr.mxu0 0.0
    %490 = vmatpush1.msra.mxu0 0.0
    %491 = vmatprep.subr.mxu0 0.0
    %492 = vmatpush1.msra.mxu0 0.0
    %493 = vmatprep.subr.mxu0 0.0
    %494 = vmatpush1.msra.mxu0 0.0
    %495 = vmatprep.subr.mxu0 0.0
    %496 = vmatpush1.msra.mxu0 0.0
    %497 = vmatprep.subr.mxu0 0.0
    %498 = vmatpush1.msra.mxu0 0.0
    %499 = vmatprep.subr.mxu0 0.0
    %500 = vmatpush1.msra.mxu0 0.0
    %501 = vmatprep.subr.mxu0 0.0
    %502 = vmatpush1.msra.mxu0 0.0
    %503 = vmatprep.subr.mxu0 0.0
    %504 = vmatpush1.msra.mxu0 0.0
    %505 = vmatprep.subr.mxu0 0.0
    %506 = vmatpush1.msra.mxu0 0.0
    %507 = vmatprep.subr.mxu0 0.0
    %508 = vmatpush1.msra.mxu0 0.0
    %509 = vmatprep.subr.mxu0 0.0
    %510 = vmatpush1.msra.mxu0 0.0
    %511 = vmatprep.subr.mxu0 0.0
    %512 = vmatpush1.msra.mxu0 0.0
    %513 = vmatprep.subr.mxu0 0.0
    %514 = vmatpush1.msra.mxu0 0.0
    %515 = vmatprep.subr.mxu0 0.0
    %516 = vmatpush1.msra.mxu0 0.0
    %517 = vmatprep.subr.mxu0 0.0
    %518 = vmatpush1.msra.mxu0 0.0
    %519 = vmatprep.subr.mxu0 0.0
    %520 = vmatpush1.msra.mxu0 0.0
    %521 = vmatprep.subr.mxu0 0.0
    %522 = vmatpush1.msra.mxu0 0.0
    %523 = vmatprep.subr.mxu0 0.0
    %524 = vmatpush1.msra.mxu0 0.0
    %525 = vmatprep.subr.mxu0 0.0
    %526 = vmatpush1.msra.mxu0 0.0
    %527 = vmatprep.subr.mxu0 0.0
    %528 = vmatpush1.msra.mxu0 0.0
    %529 = vmatprep.subr.mxu0 0.0
    %530 = vmatpush1.msra.mxu0 0.0
    %531 = vmatprep.mubr.f32.mxu0 0.0
    %532 = vmatmul.mubr.f32.gmra.mrb[0].mxu0 %v388
    %v533 = vpop.f32.mrb[0].mxu0
    %v534 = vadd.f32 0.0, %v533
    %v535 = vpop.f32.mrb[0].mxu0
    %536 = vdwg.mxu0
    %v537 = vadd.f32 %v299, %v463
    %v538 = vadd.f32 %v301, %v465
    %v539 = vadd.f32 %v370, %v534
    %541 = vset.pattern.permute.xlu0 0
    %542 = vperm.xlu0 %541, %v44
    %v543 = vpop.permute.xlu0 %542
    %v545 = vadd.f32 %v537, %v543
    %v546 = vadd.f32 %v538, %v543
    %v547 = vadd.f32 %v539, %v543
    %s548 = scalar_lea.vmem %s3, 24
    %v549 = vld [vmem:[%s548] sm:$0xff]
    %s550 = scalar_lea.vmem %s3, 32
    %v551 = vld [vmem:[%s550] sm:$0xff]
    %v554 = vcombine.high %v48, %v48
    %v555 = vcombine.high %v49, %v49
    %556 = vrot.lane.b32.xlu0 %v48, 127
    %v557 = vpop.permute.xlu0 %556
    %558 = vrot.lane.b32.xlu0 %v554, 127
    %v559 = vpop.permute.xlu0 %558
    %560 = vrot.lane.b32.xlu0 %v49, 127
    %v561 = vpop.permute.xlu0 %560
    %562 = vrot.lane.b32.xlu0 %v555, 127
    %v563 = vpop.permute.xlu0 %562
    %v564 = vsel %vm67, %v557, %v559
    %v565 = vsel %vm67, %v559, %v561
    %v566 = vsel %vm67, %v561, %v563
    %v568 = vsel %vm71, %v551, 0
    %v570 = vsel %vm75, %v564, 0
    %v572 = vsel %vm75, %v565, 0
    %v574 = vsel %vm75, %v566, 0
    %576 = vmatprep.subr.mxu0 %v572
    %577 = vmatpush1.msra.mxu0 %v570
    %578 = vmatprep.subr.mxu0 0.0
    %579 = vmatpush1.msra.mxu0 0.0
    %580 = vmatprep.subr.mxu0 0.0
    %581 = vmatpush1.msra.mxu0 0.0
    %582 = vmatprep.subr.mxu0 0.0
    %583 = vmatpush1.msra.mxu0 0.0
    %584 = vmatprep.subr.mxu0 0.0
    %585 = vmatpush1.msra.mxu0 0.0
    %586 = vmatprep.subr.mxu0 0.0
    %587 = vmatpush1.msra.mxu0 0.0
    %588 = vmatprep.subr.mxu0 0.0
    %589 = vmatpush1.msra.mxu0 0.0
    %590 = vmatprep.subr.mxu0 0.0
    %591 = vmatpush1.msra.mxu0 0.0
    %592 = vmatprep.subr.mxu0 0.0
    %593 = vmatpush1.msra.mxu0 0.0
    %594 = vmatprep.subr.mxu0 0.0
    %595 = vmatpush1.msra.mxu0 0.0
    %596 = vmatprep.subr.mxu0 0.0
    %597 = vmatpush1.msra.mxu0 0.0
    %598 = vmatprep.subr.mxu0 0.0
    %599 = vmatpush1.msra.mxu0 0.0
    %600 = vmatprep.subr.mxu0 0.0
    %601 = vmatpush1.msra.mxu0 0.0
    %602 = vmatprep.subr.mxu0 0.0
    %603 = vmatpush1.msra.mxu0 0.0
    %604 = vmatprep.subr.mxu0 0.0
    %605 = vmatpush1.msra.mxu0 0.0
    %606 = vmatprep.subr.mxu0 0.0
    %607 = vmatpush1.msra.mxu0 0.0
    %608 = vmatprep.subr.mxu0 0.0
    %609 = vmatpush1.msra.mxu0 0.0
    %610 = vmatprep.subr.mxu0 0.0
    %611 = vmatpush1.msra.mxu0 0.0
    %612 = vmatprep.subr.mxu0 0.0
    %613 = vmatpush1.msra.mxu0 0.0
    %614 = vmatprep.subr.mxu0 0.0
    %615 = vmatpush1.msra.mxu0 0.0
    %616 = vmatprep.subr.mxu0 0.0
    %617 = vmatpush1.msra.mxu0 0.0
    %618 = vmatprep.subr.mxu0 0.0
    %619 = vmatpush1.msra.mxu0 0.0
    %620 = vmatprep.subr.mxu0 0.0
    %621 = vmatpush1.msra.mxu0 0.0
    %622 = vmatprep.subr.mxu0 0.0
    %623 = vmatpush1.msra.mxu0 0.0
    %624 = vmatprep.subr.mxu0 0.0
    %625 = vmatpush1.msra.mxu0 0.0
    %626 = vmatprep.subr.mxu0 0.0
    %627 = vmatpush1.msra.mxu0 0.0
    %628 = vmatprep.subr.mxu0 0.0
    %629 = vmatpush1.msra.mxu0 0.0
    %630 = vmatprep.subr.mxu0 0.0
    %631 = vmatpush1.msra.mxu0 0.0
    %632 = vmatprep.subr.mxu0 0.0
    %633 = vmatpush1.msra.mxu0 0.0
    %634 = vmatprep.subr.mxu0 0.0
    %635 = vmatpush1.msra.mxu0 0.0
    %636 = vmatprep.subr.mxu0 0.0
    %637 = vmatpush1.msra.mxu0 0.0
    %638 = vmatprep.subr.mxu0 0.0
    %639 = vmatpush1.msra.mxu0 0.0
    %640 = vmatprep.mubr.f32.mxu0 0.0
    %641 = vmatmul.mubr.f32.gmra.mrb[0].mxu0 %v568
    %v642 = vpop.f32.mrb[0].mxu0
    %v643 = vadd.f32 0.0, %v642
    %v644 = vpop.f32.mrb[0].mxu0
    %v645 = vadd.f32 0.0, %v644
    %646 = vdwg.mxu0
    %647 = vmatprep.subr.mxu0 0.0
    %648 = vmatpush1.msra.mxu0 %v574
    %649 = vmatprep.subr.mxu0 0.0
    %650 = vmatpush1.msra.mxu0 0.0
    %651 = vmatprep.subr.mxu0 0.0
    %652 = vmatpush1.msra.mxu0 0.0
    %653 = vmatprep.subr.mxu0 0.0
    %654 = vmatpush1.msra.mxu0 0.0
    %655 = vmatprep.subr.mxu0 0.0
    %656 = vmatpush1.msra.mxu0 0.0
    %657 = vmatprep.subr.mxu0 0.0
    %658 = vmatpush1.msra.mxu0 0.0
    %659 = vmatprep.subr.mxu0 0.0
    %660 = vmatpush1.msra.mxu0 0.0
    %661 = vmatprep.subr.mxu0 0.0
    %662 = vmatpush1.msra.mxu0 0.0
    %663 = vmatprep.subr.mxu0 0.0
    %664 = vmatpush1.msra.mxu0 0.0
    %665 = vmatprep.subr.mxu0 0.0
    %666 = vmatpush1.msra.mxu0 0.0
    %667 = vmatprep.subr.mxu0 0.0
    %668 = vmatpush1.msra.mxu0 0.0
    %669 = vmatprep.subr.mxu0 0.0
    %670 = vmatpush1.msra.mxu0 0.0
    %671 = vmatprep.subr.mxu0 0.0
    %672 = vmatpush1.msra.mxu0 0.0
    %673 = vmatprep.subr.mxu0 0.0
    %674 = vmatpush1.msra.mxu0 0.0
    %675 = vmatprep.subr.mxu0 0.0
    %676 = vmatpush1.msra.mxu0 0.0
    %677 = vmatprep.subr.mxu0 0.0
    %678 = vmatpush1.msra.mxu0 0.0
    %679 = vmatprep.subr.mxu0 0.0
    %680 = vmatpush1.msra.mxu0 0.0
    %681 = vmatprep.subr.mxu0 0.0
    %682 = vmatpush1.msra.mxu0 0.0
    %683 = vmatprep.subr.mxu0 0.0
    %684 = vmatpush1.msra.mxu0 0.0
    %685 = vmatprep.subr.mxu0 0.0
    %686 = vmatpush1.msra.mxu0 0.0
    %687 = vmatprep.subr.mxu0 0.0
    %688 = vmatpush1.msra.mxu0 0.0
    %689 = vmatprep.subr.mxu0 0.0
    %690 = vmatpush1.msra.mxu0 0.0
    %691 = vmatprep.subr.mxu0 0.0
    %692 = vmatpush1.msra.mxu0 0.0
    %693 = vmatprep.subr.mxu0 0.0
    %694 = vmatpush1.msra.mxu0 0.0
    %695 = vmatprep.subr.mxu0 0.0
    %696 = vmatpush1.msra.mxu0 0.0
    %697 = vmatprep.subr.mxu0 0.0
    %698 = vmatpush1.msra.mxu0 0.0
    %699 = vmatprep.subr.mxu0 0.0
    %700 = vmatpush1.msra.mxu0 0.0
    %701 = vmatprep.subr.mxu0 0.0
    %702 = vmatpush1.msra.mxu0 0.0
    %703 = vmatprep.subr.mxu0 0.0
    %704 = vmatpush1.msra.mxu0 0.0
    %705 = vmatprep.subr.mxu0 0.0
    %706 = vmatpush1.msra.mxu0 0.0
    %707 = vmatprep.subr.mxu0 0.0
    %708 = vmatpush1.msra.mxu0 0.0
    %709 = vmatprep.subr.mxu0 0.0
    %710 = vmatpush1.msra.mxu0 0.0
    %711 = vmatprep.mubr.f32.mxu0 0.0
    %712 = vmatmul.mubr.f32.gmra.mrb[0].mxu0 %v568
    %v713 = vpop.f32.mrb[0].mxu0
    %v714 = vadd.f32 0.0, %v713
    %v715 = vpop.f32.mrb[0].mxu0
    %716 = vdwg.mxu0
    %v718 = vsel %vm71, %v549, 0
    %v720 = vsel %vm75, %v48, 0
    %v722 = vsel %vm75, %v554, 0
    %v724 = vsel %vm75, %v49, 0
    %726 = vmatprep.subr.mxu0 %v722
    %727 = vmatpush1.msra.mxu0 %v720
    %728 = vmatprep.subr.mxu0 0.0
    %729 = vmatpush1.msra.mxu0 0.0
    %730 = vmatprep.subr.mxu0 0.0
    %731 = vmatpush1.msra.mxu0 0.0
    %732 = vmatprep.subr.mxu0 0.0
    %733 = vmatpush1.msra.mxu0 0.0
    %734 = vmatprep.subr.mxu0 0.0
    %735 = vmatpush1.msra.mxu0 0.0
    %736 = vmatprep.subr.mxu0 0.0
    %737 = vmatpush1.msra.mxu0 0.0
    %738 = vmatprep.subr.mxu0 0.0
    %739 = vmatpush1.msra.mxu0 0.0
    %740 = vmatprep.subr.mxu0 0.0
    %741 = vmatpush1.msra.mxu0 0.0
    %742 = vmatprep.subr.mxu0 0.0
    %743 = vmatpush1.msra.mxu0 0.0
    %744 = vmatprep.subr.mxu0 0.0
    %745 = vmatpush1.msra.mxu0 0.0
    %746 = vmatprep.subr.mxu0 0.0
    %747 = vmatpush1.msra.mxu0 0.0
    %748 = vmatprep.subr.mxu0 0.0
    %749 = vmatpush1.msra.mxu0 0.0
    %750 = vmatprep.subr.mxu0 0.0
    %751 = vmatpush1.msra.mxu0 0.0
    %752 = vmatprep.subr.mxu0 0.0
    %753 = vmatpush1.msra.mxu0 0.0
    %754 = vmatprep.subr.mxu0 0.0
    %755 = vmatpush1.msra.mxu0 0.0
    %756 = vmatprep.subr.mxu0 0.0
    %757 = vmatpush1.msra.mxu0 0.0
    %758 = vmatprep.subr.mxu0 0.0
    %759 = vmatpush1.msra.mxu0 0.0
    %760 = vmatprep.subr.mxu0 0.0
    %761 = vmatpush1.msra.mxu0 0.0
    %762 = vmatprep.subr.mxu0 0.0
    %763 = vmatpush1.msra.mxu0 0.0
    %764 = vmatprep.subr.mxu0 0.0
    %765 = vmatpush1.msra.mxu0 0.0
    %766 = vmatprep.subr.mxu0 0.0
    %767 = vmatpush1.msra.mxu0 0.0
    %768 = vmatprep.subr.mxu0 0.0
    %769 = vmatpush1.msra.mxu0 0.0
    %770 = vmatprep.subr.mxu0 0.0
    %771 = vmatpush1.msra.mxu0 0.0
    %772 = vmatprep.subr.mxu0 0.0
    %773 = vmatpush1.msra.mxu0 0.0
    %774 = vmatprep.subr.mxu0 0.0
    %775 = vmatpush1.msra.mxu0 0.0
    %776 = vmatprep.subr.mxu0 0.0
    %777 = vmatpush1.msra.mxu0 0.0
    %778 = vmatprep.subr.mxu0 0.0
    %779 = vmatpush1.msra.mxu0 0.0
    %780 = vmatprep.subr.mxu0 0.0
    %781 = vmatpush1.msra.mxu0 0.0
    %782 = vmatprep.subr.mxu0 0.0
    %783 = vmatpush1.msra.mxu0 0.0
    %784 = vmatprep.subr.mxu0 0.0
    %785 = vmatpush1.msra.mxu0 0.0
    %786 = vmatprep.subr.mxu0 0.0
    %787 = vmatpush1.msra.mxu0 0.0
    %788 = vmatprep.subr.mxu0 0.0
    %789 = vmatpush1.msra.mxu0 0.0
    %790 = vmatprep.mubr.f32.mxu0 0.0
    %791 = vmatmul.mubr.f32.gmra.mrb[0].mxu0 %v718
    %v792 = vpop.f32.mrb[0].mxu0
    %v793 = vadd.f32 %v643, %v792
    %v794 = vpop.f32.mrb[0].mxu0
    %v795 = vadd.f32 %v645, %v794
    %796 = vdwg.mxu0
    %797 = vmatprep.subr.mxu0 0.0
    %798 = vmatpush1.msra.mxu0 %v724
    %799 = vmatprep.subr.mxu0 0.0
    %800 = vmatpush1.msra.mxu0 0.0
    %801 = vmatprep.subr.mxu0 0.0
    %802 = vmatpush1.msra.mxu0 0.0
    %803 = vmatprep.subr.mxu0 0.0
    %804 = vmatpush1.msra.mxu0 0.0
    %805 = vmatprep.subr.mxu0 0.0
    %806 = vmatpush1.msra.mxu0 0.0
    %807 = vmatprep.subr.mxu0 0.0
    %808 = vmatpush1.msra.mxu0 0.0
    %809 = vmatprep.subr.mxu0 0.0
    %810 = vmatpush1.msra.mxu0 0.0
    %811 = vmatprep.subr.mxu0 0.0
    %812 = vmatpush1.msra.mxu0 0.0
    %813 = vmatprep.subr.mxu0 0.0
    %814 = vmatpush1.msra.mxu0 0.0
    %815 = vmatprep.subr.mxu0 0.0
    %816 = vmatpush1.msra.mxu0 0.0
    %817 = vmatprep.subr.mxu0 0.0
    %818 = vmatpush1.msra.mxu0 0.0
    %819 = vmatprep.subr.mxu0 0.0
    %820 = vmatpush1.msra.mxu0 0.0
    %821 = vmatprep.subr.mxu0 0.0
    %822 = vmatpush1.msra.mxu0 0.0
    %823 = vmatprep.subr.mxu0 0.0
    %824 = vmatpush1.msra.mxu0 0.0
    %825 = vmatprep.subr.mxu0 0.0
    %826 = vmatpush1.msra.mxu0 0.0
    %827 = vmatprep.subr.mxu0 0.0
    %828 = vmatpush1.msra.mxu0 0.0
    %829 = vmatprep.subr.mxu0 0.0
    %830 = vmatpush1.msra.mxu0 0.0
    %831 = vmatprep.subr.mxu0 0.0
    %832 = vmatpush1.msra.mxu0 0.0
    %833 = vmatprep.subr.mxu0 0.0
    %834 = vmatpush1.msra.mxu0 0.0
    %835 = vmatprep.subr.mxu0 0.0
    %836 = vmatpush1.msra.mxu0 0.0
    %837 = vmatprep.subr.mxu0 0.0
    %838 = vmatpush1.msra.mxu0 0.0
    %839 = vmatprep.subr.mxu0 0.0
    %840 = vmatpush1.msra.mxu0 0.0
    %841 = vmatprep.subr.mxu0 0.0
    %842 = vmatpush1.msra.mxu0 0.0
    %843 = vmatprep.subr.mxu0 0.0
    %844 = vmatpush1.msra.mxu0 0.0
    %845 = vmatprep.subr.mxu0 0.0
    %846 = vmatpush1.msra.mxu0 0.0
    %847 = vmatprep.subr.mxu0 0.0
    %848 = vmatpush1.msra.mxu0 0.0
    %849 = vmatprep.subr.mxu0 0.0
    %850 = vmatpush1.msra.mxu0 0.0
    %851 = vmatprep.subr.mxu0 0.0
    %852 = vmatpush1.msra.mxu0 0.0
    %853 = vmatprep.subr.mxu0 0.0
    %854 = vmatpush1.msra.mxu0 0.0
    %855 = vmatprep.subr.mxu0 0.0
    %856 = vmatpush1.msra.mxu0 0.0
    %857 = vmatprep.subr.mxu0 0.0
    %858 = vmatpush1.msra.mxu0 0.0
    %859 = vmatprep.subr.mxu0 0.0
    %860 = vmatpush1.msra.mxu0 0.0
    %861 = vmatprep.mubr.f32.mxu0 0.0
    %862 = vmatmul.mubr.f32.gmra.mrb[0].mxu0 %v718
    %v863 = vpop.f32.mrb[0].mxu0
    %v864 = vadd.f32 %v714, %v863
    %v865 = vpop.f32.mrb[0].mxu0
    %866 = vdwg.mxu0
    %vm867 = vcmask 64512
    %v869 = vsel %vm867, %v45, 0
    %871 = vmatprep.subr.mxu0 %v546
    %872 = vmatpush1.msra.mxu0 %v545
    %873 = vmatprep.subr.mxu0 0.0
    %874 = vmatpush1.msra.mxu0 0.0
    %875 = vmatprep.subr.mxu0 0.0
    %876 = vmatpush1.msra.mxu0 0.0
    %877 = vmatprep.subr.mxu0 0.0
    %878 = vmatpush1.msra.mxu0 0.0
    %879 = vmatprep.subr.mxu0 0.0
    %880 = vmatpush1.msra.mxu0 0.0
    %881 = vmatprep.subr.mxu0 0.0
    %882 = vmatpush1.msra.mxu0 0.0
    %883 = vmatprep.subr.mxu0 0.0
    %884 = vmatpush1.msra.mxu0 0.0
    %885 = vmatprep.subr.mxu0 0.0
    %886 = vmatpush1.msra.mxu0 0.0
    %887 = vmatprep.subr.mxu0 0.0
    %888 = vmatpush1.msra.mxu0 0.0
    %889 = vmatprep.subr.mxu0 0.0
    %890 = vmatpush1.msra.mxu0 0.0
    %891 = vmatprep.subr.mxu0 0.0
    %892 = vmatpush1.msra.mxu0 0.0
    %893 = vmatprep.subr.mxu0 0.0
    %894 = vmatpush1.msra.mxu0 0.0
    %895 = vmatprep.subr.mxu0 0.0
    %896 = vmatpush1.msra.mxu0 0.0
    %897 = vmatprep.subr.mxu0 0.0
    %898 = vmatpush1.msra.mxu0 0.0
    %899 = vmatprep.subr.mxu0 0.0
    %900 = vmatpush1.msra.mxu0 0.0
    %901 = vmatprep.subr.mxu0 0.0
    %902 = vmatpush1.msra.mxu0 0.0
    %903 = vmatprep.subr.mxu0 0.0
    %904 = vmatpush1.msra.mxu0 0.0
    %905 = vmatprep.subr.mxu0 0.0
    %906 = vmatpush1.msra.mxu0 0.0
    %907 = vmatprep.subr.mxu0 0.0
    %908 = vmatpush1.msra.mxu0 0.0
    %909 = vmatprep.subr.mxu0 0.0
    %910 = vmatpush1.msra.mxu0 0.0
    %911 = vmatprep.subr.mxu0 0.0
    %912 = vmatpush1.msra.mxu0 0.0
    %913 = vmatprep.subr.mxu0 0.0
    %914 = vmatpush1.msra.mxu0 0.0
    %915 = vmatprep.subr.mxu0 0.0
    %916 = vmatpush1.msra.mxu0 0.0
    %917 = vmatprep.subr.mxu0 0.0
    %918 = vmatpush1.msra.mxu0 0.0
    %919 = vmatprep.subr.mxu0 0.0
    %920 = vmatpush1.msra.mxu0 0.0
    %921 = vmatprep.subr.mxu0 0.0
    %922 = vmatpush1.msra.mxu0 0.0
    %923 = vmatprep.subr.mxu0 0.0
    %924 = vmatpush1.msra.mxu0 0.0
    %925 = vmatprep.subr.mxu0 0.0
    %926 = vmatpush1.msra.mxu0 0.0
    %927 = vmatprep.subr.mxu0 0.0
    %928 = vmatpush1.msra.mxu0 0.0
    %929 = vmatprep.subr.mxu0 0.0
    %930 = vmatpush1.msra.mxu0 0.0
    %931 = vmatprep.subr.mxu0 0.0
    %932 = vmatpush1.msra.mxu0 0.0
    %933 = vmatprep.subr.mxu0 0.0
    %934 = vmatpush1.msra.mxu0 0.0
    %935 = vmatprep.mubr.f32.mxu0 0.0
    %936 = vmatmul.mubr.f32.gmra.mrb[0].mxu0 %v869
    %v937 = vpop.f32.mrb[0].mxu0
    %v938 = vadd.f32 0.0, %v937
    %v939 = vpop.f32.mrb[0].mxu0
    %v940 = vadd.f32 0.0, %v939
    %941 = vdwg.mxu0
    %942 = vmatprep.subr.mxu0 0.0
    %943 = vmatpush1.msra.mxu0 %v547
    %944 = vmatprep.subr.mxu0 0.0
    %945 = vmatpush1.msra.mxu0 0.0
    %946 = vmatprep.subr.mxu0 0.0
    %947 = vmatpush1.msra.mxu0 0.0
    %948 = vmatprep.subr.mxu0 0.0
    %949 = vmatpush1.msra.mxu0 0.0
    %950 = vmatprep.subr.mxu0 0.0
    %951 = vmatpush1.msra.mxu0 0.0
    %952 = vmatprep.subr.mxu0 0.0
    %953 = vmatpush1.msra.mxu0 0.0
    %954 = vmatprep.subr.mxu0 0.0
    %955 = vmatpush1.msra.mxu0 0.0
    %956 = vmatprep.subr.mxu0 0.0
    %957 = vmatpush1.msra.mxu0 0.0
    %958 = vmatprep.subr.mxu0 0.0
    %959 = vmatpush1.msra.mxu0 0.0
    %960 = vmatprep.subr.mxu0 0.0
    %961 = vmatpush1.msra.mxu0 0.0
    %962 = vmatprep.subr.mxu0 0.0
    %963 = vmatpush1.msra.mxu0 0.0
    %964 = vmatprep.subr.mxu0 0.0
    %965 = vmatpush1.msra.mxu0 0.0
    %966 = vmatprep.subr.mxu0 0.0
    %967 = vmatpush1.msra.mxu0 0.0
    %968 = vmatprep.subr.mxu0 0.0
    %969 = vmatpush1.msra.mxu0 0.0
    %970 = vmatprep.subr.mxu0 0.0
    %971 = vmatpush1.msra.mxu0 0.0
    %972 = vmatprep.subr.mxu0 0.0
    %973 = vmatpush1.msra.mxu0 0.0
    %974 = vmatprep.subr.mxu0 0.0
    %975 = vmatpush1.msra.mxu0 0.0
    %976 = vmatprep.subr.mxu0 0.0
    %977 = vmatpush1.msra.mxu0 0.0
    %978 = vmatprep.subr.mxu0 0.0
    %979 = vmatpush1.msra.mxu0 0.0
    %980 = vmatprep.subr.mxu0 0.0
    %981 = vmatpush1.msra.mxu0 0.0
    %982 = vmatprep.subr.mxu0 0.0
    %983 = vmatpush1.msra.mxu0 0.0
    %984 = vmatprep.subr.mxu0 0.0
    %985 = vmatpush1.msra.mxu0 0.0
    %986 = vmatprep.subr.mxu0 0.0
    %987 = vmatpush1.msra.mxu0 0.0
    %988 = vmatprep.subr.mxu0 0.0
    %989 = vmatpush1.msra.mxu0 0.0
    %990 = vmatprep.subr.mxu0 0.0
    %991 = vmatpush1.msra.mxu0 0.0
    %992 = vmatprep.subr.mxu0 0.0
    %993 = vmatpush1.msra.mxu0 0.0
    %994 = vmatprep.subr.mxu0 0.0
    %995 = vmatpush1.msra.mxu0 0.0
    %996 = vmatprep.subr.mxu0 0.0
    %997 = vmatpush1.msra.mxu0 0.0
    %998 = vmatprep.subr.mxu0 0.0
    %999 = vmatpush1.msra.mxu0 0.0
    %1000 = vmatprep.subr.mxu0 0.0
    %1001 = vmatpush1.msra.mxu0 0.0
    %1002 = vmatprep.subr.mxu0 0.0
    %1003 = vmatpush1.msra.mxu0 0.0
    %1004 = vmatprep.subr.mxu0 0.0
    %1005 = vmatpush1.msra.mxu0 0.0
    %1006 = vmatprep.mubr.f32.mxu0 0.0
    %1007 = vmatmul.mubr.f32.gmra.mrb[0].mxu0 %v869
    %v1008 = vpop.f32.mrb[0].mxu0
    %v1009 = vadd.f32 0.0, %v1008
    %v1010 = vpop.f32.mrb[0].mxu0
    %1011 = vdwg.mxu0
    %v1012 = vadd.f32 %v793, %v938
    %v1013 = vadd.f32 %v795, %v940
    %v1014 = vadd.f32 %v864, %v1009
    %1015 = vrot.lane.b32.xlu0 %v45, 120
    %v1016 = vpop.permute.xlu0 %1015
    %v1019 = vcombine.high %v50, %v50
    %v1020 = vsel %vm71, %v1016, 0
    %v1022 = vsel %vm75, %v50, 0
    %v1024 = vsel %vm75, %v1019, 0
    %v1026 = vsel %vm75, %v51, 0
    %1028 = vmatprep.subr.mxu0 %v1024
    %1029 = vmatpush1.msra.mxu0 %v1022
    %1030 = vmatprep.subr.mxu0 0.0
    %1031 = vmatpush1.msra.mxu0 0.0
    %1032 = vmatprep.subr.mxu0 0.0
    %1033 = vmatpush1.msra.mxu0 0.0
    %1034 = vmatprep.subr.mxu0 0.0
    %1035 = vmatpush1.msra.mxu0 0.0
    %1036 = vmatprep.subr.mxu0 0.0
    %1037 = vmatpush1.msra.mxu0 0.0
    %1038 = vmatprep.subr.mxu0 0.0
    %1039 = vmatpush1.msra.mxu0 0.0
    %1040 = vmatprep.subr.mxu0 0.0
    %1041 = vmatpush1.msra.mxu0 0.0
    %1042 = vmatprep.subr.mxu0 0.0
    %1043 = vmatpush1.msra.mxu0 0.0
    %1044 = vmatprep.subr.mxu0 0.0
    %1045 = vmatpush1.msra.mxu0 0.0
    %1046 = vmatprep.subr.mxu0 0.0
    %1047 = vmatpush1.msra.mxu0 0.0
    %1048 = vmatprep.subr.mxu0 0.0
    %1049 = vmatpush1.msra.mxu0 0.0
    %1050 = vmatprep.subr.mxu0 0.0
    %1051 = vmatpush1.msra.mxu0 0.0
    %1052 = vmatprep.subr.mxu0 0.0
    %1053 = vmatpush1.msra.mxu0 0.0
    %1054 = vmatprep.subr.mxu0 0.0
    %1055 = vmatpush1.msra.mxu0 0.0
    %1056 = vmatprep.subr.mxu0 0.0
    %1057 = vmatpush1.msra.mxu0 0.0
    %1058 = vmatprep.subr.mxu0 0.0
    %1059 = vmatpush1.msra.mxu0 0.0
    %1060 = vmatprep.subr.mxu0 0.0
    %1061 = vmatpush1.msra.mxu0 0.0
    %1062 = vmatprep.subr.mxu0 0.0
    %1063 = vmatpush1.msra.mxu0 0.0
    %1064 = vmatprep.subr.mxu0 0.0
    %1065 = vmatpush1.msra.mxu0 0.0
    %1066 = vmatprep.subr.mxu0 0.0
    %1067 = vmatpush1.msra.mxu0 0.0
    %1068 = vmatprep.subr.mxu0 0.0
    %1069 = vmatpush1.msra.mxu0 0.0
    %1070 = vmatprep.subr.mxu0 0.0
    %1071 = vmatpush1.msra.mxu0 0.0
    %1072 = vmatprep.subr.mxu0 0.0
    %1073 = vmatpush1.msra.mxu0 0.0
    %1074 = vmatprep.subr.mxu0 0.0
    %1075 = vmatpush1.msra.mxu0 0.0
    %1076 = vmatprep.subr.mxu0 0.0
    %1077 = vmatpush1.msra.mxu0 0.0
    %1078 = vmatprep.subr.mxu0 0.0
    %1079 = vmatpush1.msra.mxu0 0.0
    %1080 = vmatprep.subr.mxu0 0.0
    %1081 = vmatpush1.msra.mxu0 0.0
    %1082 = vmatprep.subr.mxu0 0.0
    %1083 = vmatpush1.msra.mxu0 0.0
    %1084 = vmatprep.subr.mxu0 0.0
    %1085 = vmatpush1.msra.mxu0 0.0
    %1086 = vmatprep.subr.mxu0 0.0
    %1087 = vmatpush1.msra.mxu0 0.0
    %1088 = vmatprep.subr.mxu0 0.0
    %1089 = vmatpush1.msra.mxu0 0.0
    %1090 = vmatprep.subr.mxu0 0.0
    %1091 = vmatpush1.msra.mxu0 0.0
    %1092 = vmatprep.mubr.f32.mxu0 0.0
    %1093 = vmatmul.mubr.f32.gmra.mrb[0].mxu0 %v1020
    %v1094 = vpop.f32.mrb[0].mxu0
    %v1095 = vadd.f32 0.0, %v1094
    %v1096 = vpop.f32.mrb[0].mxu0
    %v1097 = vadd.f32 0.0, %v1096
    %1098 = vdwg.mxu0
    %1099 = vmatprep.subr.mxu0 0.0
    %1100 = vmatpush1.msra.mxu0 %v1026
    %1101 = vmatprep.subr.mxu0 0.0
    %1102 = vmatpush1.msra.mxu0 0.0
    %1103 = vmatprep.subr.mxu0 0.0
    %1104 = vmatpush1.msra.mxu0 0.0
    %1105 = vmatprep.subr.mxu0 0.0
    %1106 = vmatpush1.msra.mxu0 0.0
    %1107 = vmatprep.subr.mxu0 0.0
    %1108 = vmatpush1.msra.mxu0 0.0
    %1109 = vmatprep.subr.mxu0 0.0
    %1110 = vmatpush1.msra.mxu0 0.0
    %1111 = vmatprep.subr.mxu0 0.0
    %1112 = vmatpush1.msra.mxu0 0.0
    %1113 = vmatprep.subr.mxu0 0.0
    %1114 = vmatpush1.msra.mxu0 0.0
    %1115 = vmatprep.subr.mxu0 0.0
    %1116 = vmatpush1.msra.mxu0 0.0
    %1117 = vmatprep.subr.mxu0 0.0
    %1118 = vmatpush1.msra.mxu0 0.0
    %1119 = vmatprep.subr.mxu0 0.0
    %1120 = vmatpush1.msra.mxu0 0.0
    %1121 = vmatprep.subr.mxu0 0.0
    %1122 = vmatpush1.msra.mxu0 0.0
    %1123 = vmatprep.subr.mxu0 0.0
    %1124 = vmatpush1.msra.mxu0 0.0
    %1125 = vmatprep.subr.mxu0 0.0
    %1126 = vmatpush1.msra.mxu0 0.0
    %1127 = vmatprep.subr.mxu0 0.0
    %1128 = vmatpush1.msra.mxu0 0.0
    %1129 = vmatprep.subr.mxu0 0.0
    %1130 = vmatpush1.msra.mxu0 0.0
    %1131 = vmatprep.subr.mxu0 0.0
    %1132 = vmatpush1.msra.mxu0 0.0
    %1133 = vmatprep.subr.mxu0 0.0
    %1134 = vmatpush1.msra.mxu0 0.0
    %1135 = vmatprep.subr.mxu0 0.0
    %1136 = vmatpush1.msra.mxu0 0.0
    %1137 = vmatprep.subr.mxu0 0.0
    %1138 = vmatpush1.msra.mxu0 0.0
    %1139 = vmatprep.subr.mxu0 0.0
    %1140 = vmatpush1.msra.mxu0 0.0
    %1141 = vmatprep.subr.mxu0 0.0
    %1142 = vmatpush1.msra.mxu0 0.0
    %1143 = vmatprep.subr.mxu0 0.0
    %1144 = vmatpush1.msra.mxu0 0.0
    %1145 = vmatprep.subr.mxu0 0.0
    %1146 = vmatpush1.msra.mxu0 0.0
    %1147 = vmatprep.subr.mxu0 0.0
    %1148 = vmatpush1.msra.mxu0 0.0
    %1149 = vmatprep.subr.mxu0 0.0
    %1150 = vmatpush1.msra.mxu0 0.0
    %1151 = vmatprep.subr.mxu0 0.0
    %1152 = vmatpush1.msra.mxu0 0.0
    %1153 = vmatprep.subr.mxu0 0.0
    %1154 = vmatpush1.msra.mxu0 0.0
    %1155 = vmatprep.subr.mxu0 0.0
    %1156 = vmatpush1.msra.mxu0 0.0
    %1157 = vmatprep.subr.mxu0 0.0
    %1158 = vmatpush1.msra.mxu0 0.0
    %1159 = vmatprep.subr.mxu0 0.0
    %1160 = vmatpush1.msra.mxu0 0.0
    %1161 = vmatprep.subr.mxu0 0.0
    %1162 = vmatpush1.msra.mxu0 0.0
    %1163 = vmatprep.mubr.f32.mxu0 0.0
    %1164 = vmatmul.mubr.f32.gmra.mrb[0].mxu0 %v1020
    %v1165 = vpop.f32.mrb[0].mxu0
    %v1166 = vadd.f32 0.0, %v1165
    %v1167 = vpop.f32.mrb[0].mxu0
    %1168 = vdwg.mxu0
    %v1169 = vadd.f32 %v1012, %v1095
    %v1170 = vadd.f32 %v1013, %v1097
    %v1171 = vadd.f32 %v1014, %v1166
    %1172 = vset.pattern.permute.xlu0 1
    %1173 = vperm.xlu0 %1172, %v44
    %v1174 = vpop.permute.xlu0 %1173
    %v1176 = vadd.f32 %v1169, %v1174
    %v1177 = vadd.f32 %v1170, %v1174
    %v1178 = vadd.f32 %v1171, %v1174
    %v1179 = vtanh.pop %v545
    %v1180 = vtanh.pop %v546
    %v1181 = vtanh.pop %v547
    %v1182 = vxor.u32 %v545, 2147483648
    %v1183 = vxor.u32 %v546, 2147483648
    %v1184 = vxor.u32 %v547, 2147483648
    %v1185 = vmul.f32 %v1182, 1.442695
    %v1186 = vpow.pop %v1185
    %v1187 = vmul.f32 %v1183, 1.442695
    %v1188 = vpow.pop %v1187
    %v1189 = vmul.f32 %v1184, 1.442695
    %v1190 = vpow.pop %v1189
    %v1191 = vadd.f32 %v1186, 1.0
    %v1192 = vadd.f32 %v1188, 1.0
    %v1193 = vadd.f32 %v1190, 1.0
    %v1194 = vrcp.pop %v1191
    %v1195 = vmul.f32 1.0, %v1194
    %v1196 = vrcp.pop %v1192
    %v1197 = vmul.f32 1.0, %v1196
    %v1198 = vrcp.pop %v1193
    %v1199 = vmul.f32 1.0, %v1198
    %v1203 = vrot.slane %v1195, 4
    %v1204 = vrot.slane %v1197, 4
    %v1205 = vrot.slane %v1199, 4
    %v1209 = vmul.f32 %v1179, %v1203
    %v1210 = vmul.f32 %v1180, %v1204
    %v1211 = vmul.f32 %v1181, %v1205
    %v1212 = vtanh.pop %v1176
    %v1213 = vtanh.pop %v1177
    %v1214 = vtanh.pop %v1178
    %v1215 = vxor.u32 %v1176, 2147483648
    %v1216 = vxor.u32 %v1177, 2147483648
    %v1217 = vxor.u32 %v1178, 2147483648
    %v1218 = vmul.f32 %v1215, 1.442695
    %v1219 = vpow.pop %v1218
    %v1220 = vmul.f32 %v1216, 1.442695
    %v1221 = vpow.pop %v1220
    %v1222 = vmul.f32 %v1217, 1.442695
    %v1223 = vpow.pop %v1222
    %v1224 = vadd.f32 %v1219, 1.0
    %v1225 = vadd.f32 %v1221, 1.0
    %v1226 = vadd.f32 %v1223, 1.0
    %v1227 = vrcp.pop %v1224
    %v1228 = vmul.f32 1.0, %v1227
    %v1229 = vrcp.pop %v1225
    %v1230 = vmul.f32 1.0, %v1229
    %v1231 = vrcp.pop %v1226
    %v1232 = vmul.f32 1.0, %v1231
    %v1236 = vrot.slane %v1228, 4
    %v1237 = vrot.slane %v1230, 4
    %v1238 = vrot.slane %v1232, 4
    %v1242 = vmul.f32 %v1212, %v1236
    %v1243 = vmul.f32 %v1213, %v1237
    %v1244 = vmul.f32 %v1214, %v1238
    %v1245 = vld [vmem:[%s5] sm:$0xf]
    %v1250 = vsel %vm71, %v1245, 0
    %v1253 = vsel %vm75, %v1242, 0
    %v1256 = vsel %vm75, %v1243, 0
    %v1259 = vsel %vm75, %v1244, 0
    %1261 = vmatprep.subr.mxu0 %v1256
    %1262 = vmatpush1.msra.mxu0 %v1253
    %1263 = vmatprep.subr.mxu0 0.0
    %1264 = vmatpush1.msra.mxu0 0.0
    %1265 = vmatprep.subr.mxu0 0.0
    %1266 = vmatpush1.msra.mxu0 0.0
    %1267 = vmatprep.subr.mxu0 0.0
    %1268 = vmatpush1.msra.mxu0 0.0
    %1269 = vmatprep.subr.mxu0 0.0
    %1270 = vmatpush1.msra.mxu0 0.0
    %1271 = vmatprep.subr.mxu0 0.0
    %1272 = vmatpush1.msra.mxu0 0.0
    %1273 = vmatprep.subr.mxu0 0.0
    %1274 = vmatpush1.msra.mxu0 0.0
    %1275 = vmatprep.subr.mxu0 0.0
    %1276 = vmatpush1.msra.mxu0 0.0
    %1277 = vmatprep.subr.mxu0 0.0
    %1278 = vmatpush1.msra.mxu0 0.0
    %1279 = vmatprep.subr.mxu0 0.0
    %1280 = vmatpush1.msra.mxu0 0.0
    %1281 = vmatprep.subr.mxu0 0.0
    %1282 = vmatpush1.msra.mxu0 0.0
    %1283 = vmatprep.subr.mxu0 0.0
    %1284 = vmatpush1.msra.mxu0 0.0
    %1285 = vmatprep.subr.mxu0 0.0
    %1286 = vmatpush1.msra.mxu0 0.0
    %1287 = vmatprep.subr.mxu0 0.0
    %1288 = vmatpush1.msra.mxu0 0.0
    %1289 = vmatprep.subr.mxu0 0.0
    %1290 = vmatpush1.msra.mxu0 0.0
    %1291 = vmatprep.subr.mxu0 0.0
    %1292 = vmatpush1.msra.mxu0 0.0
    %1293 = vmatprep.subr.mxu0 0.0
    %1294 = vmatpush1.msra.mxu0 0.0
    %1295 = vmatprep.subr.mxu0 0.0
    %1296 = vmatpush1.msra.mxu0 0.0
    %1297 = vmatprep.subr.mxu0 0.0
    %1298 = vmatpush1.msra.mxu0 0.0
    %1299 = vmatprep.subr.mxu0 0.0
    %1300 = vmatpush1.msra.mxu0 0.0
    %1301 = vmatprep.subr.mxu0 0.0
    %1302 = vmatpush1.msra.mxu0 0.0
    %1303 = vmatprep.subr.mxu0 0.0
    %1304 = vmatpush1.msra.mxu0 0.0
    %1305 = vmatprep.subr.mxu0 0.0
    %1306 = vmatpush1.msra.mxu0 0.0
    %1307 = vmatprep.subr.mxu0 0.0
    %1308 = vmatpush1.msra.mxu0 0.0
    %1309 = vmatprep.subr.mxu0 0.0
    %1310 = vmatpush1.msra.mxu0 0.0
    %1311 = vmatprep.subr.mxu0 0.0
    %1312 = vmatpush1.msra.mxu0 0.0
    %1313 = vmatprep.subr.mxu0 0.0
    %1314 = vmatpush1.msra.mxu0 0.0
    %1315 = vmatprep.subr.mxu0 0.0
    %1316 = vmatpush1.msra.mxu0 0.0
    %1317 = vmatprep.subr.mxu0 0.0
    %1318 = vmatpush1.msra.mxu0 0.0
    %1319 = vmatprep.subr.mxu0 0.0
    %1320 = vmatpush1.msra.mxu0 0.0
    %1321 = vmatprep.subr.mxu0 0.0
    %1322 = vmatpush1.msra.mxu0 0.0
    %1323 = vmatprep.subr.mxu0 0.0
    %1324 = vmatpush1.msra.mxu0 0.0
    %1325 = vmatprep.mubr.f32.mxu0 0.0
    %1326 = vmatmul.mubr.f32.gmra.mrb[0].mxu0 %v1250
    %v1327 = vpop.f32.mrb[0].mxu0
    %v1328 = vadd.f32 %v564, %v1327
    %v1329 = vpop.f32.mrb[0].mxu0
    %v1330 = vadd.f32 %v565, %v1329
    %1331 = vdwg.mxu0
    %1332 = vmatprep.subr.mxu0 0.0
    %1333 = vmatpush1.msra.mxu0 %v1259
    %1334 = vmatprep.subr.mxu0 0.0
    %1335 = vmatpush1.msra.mxu0 0.0
    %1336 = vmatprep.subr.mxu0 0.0
    %1337 = vmatpush1.msra.mxu0 0.0
    %1338 = vmatprep.subr.mxu0 0.0
    %1339 = vmatpush1.msra.mxu0 0.0
    %1340 = vmatprep.subr.mxu0 0.0
    %1341 = vmatpush1.msra.mxu0 0.0
    %1342 = vmatprep.subr.mxu0 0.0
    %1343 = vmatpush1.msra.mxu0 0.0
    %1344 = vmatprep.subr.mxu0 0.0
    %1345 = vmatpush1.msra.mxu0 0.0
    %1346 = vmatprep.subr.mxu0 0.0
    %1347 = vmatpush1.msra.mxu0 0.0
    %1348 = vmatprep.subr.mxu0 0.0
    %1349 = vmatpush1.msra.mxu0 0.0
    %1350 = vmatprep.subr.mxu0 0.0
    %1351 = vmatpush1.msra.mxu0 0.0
    %1352 = vmatprep.subr.mxu0 0.0
    %1353 = vmatpush1.msra.mxu0 0.0
    %1354 = vmatprep.subr.mxu0 0.0
    %1355 = vmatpush1.msra.mxu0 0.0
    %1356 = vmatprep.subr.mxu0 0.0
    %1357 = vmatpush1.msra.mxu0 0.0
    %1358 = vmatprep.subr.mxu0 0.0
    %1359 = vmatpush1.msra.mxu0 0.0
    %1360 = vmatprep.subr.mxu0 0.0
    %1361 = vmatpush1.msra.mxu0 0.0
    %1362 = vmatprep.subr.mxu0 0.0
    %1363 = vmatpush1.msra.mxu0 0.0
    %1364 = vmatprep.subr.mxu0 0.0
    %1365 = vmatpush1.msra.mxu0 0.0
    %1366 = vmatprep.subr.mxu0 0.0
    %1367 = vmatpush1.msra.mxu0 0.0
    %1368 = vmatprep.subr.mxu0 0.0
    %1369 = vmatpush1.msra.mxu0 0.0
    %1370 = vmatprep.subr.mxu0 0.0
    %1371 = vmatpush1.msra.mxu0 0.0
    %1372 = vmatprep.subr.mxu0 0.0
    %1373 = vmatpush1.msra.mxu0 0.0
    %1374 = vmatprep.subr.mxu0 0.0
    %1375 = vmatpush1.msra.mxu0 0.0
    %1376 = vmatprep.subr.mxu0 0.0
    %1377 = vmatpush1.msra.mxu0 0.0
    %1378 = vmatprep.subr.mxu0 0.0
    %1379 = vmatpush1.msra.mxu0 0.0
    %1380 = vmatprep.subr.mxu0 0.0
    %1381 = vmatpush1.msra.mxu0 0.0
    %1382 = vmatprep.subr.mxu0 0.0
    %1383 = vmatpush1.msra.mxu0 0.0
    %1384 = vmatprep.subr.mxu0 0.0
    %1385 = vmatpush1.msra.mxu0 0.0
    %1386 = vmatprep.subr.mxu0 0.0
    %1387 = vmatpush1.msra.mxu0 0.0
    %1388 = vmatprep.subr.mxu0 0.0
    %1389 = vmatpush1.msra.mxu0 0.0
    %1390 = vmatprep.subr.mxu0 0.0
    %1391 = vmatpush1.msra.mxu0 0.0
    %1392 = vmatprep.subr.mxu0 0.0
    %1393 = vmatpush1.msra.mxu0 0.0
    %1394 = vmatprep.subr.mxu0 0.0
    %1395 = vmatpush1.msra.mxu0 0.0
    %1396 = vmatprep.mubr.f32.mxu0 0.0
    %1397 = vmatmul.mubr.f32.gmra.mrb[0].mxu0 %v1250
    %v1398 = vpop.f32.mrb[0].mxu0
    %v1399 = vadd.f32 %v566, %v1398
    %v1400 = vpop.f32.mrb[0].mxu0
    %1401 = vdwg.mxu0
    %v1404 = vcombine.low %v1209, %v1210
    %1406 = vst [vmem:[#allocation5] sm:$0xff] %v1404
    %1407 = vst [vmem:[#allocation5 + $0x8] sm:$0xf] %v1211
    %v1410 = vcombine.low %v1328, %v1330
    %1412 = vst [vmem:[#allocation6] sm:$0xff] %v1410
    %1413 = vst [vmem:[#allocation6 + $0x8] sm:$0xf] %v1399
    %s1414 = scalar_lea.vmem %s0, 16
    %v1415 = vld [vmem:[%s1414] sm:$0xff]
    %v1416 = vld [vmem:[%s1414 + $0x8] sm:$0xff]
    %s1417 = scalar_lea.vmem %s1, 16
    %v1418 = vld [vmem:[%s1417] sm:$0xff]
    %v1419 = vld [vmem:[%s1417 + $0x8] sm:$0xff]
    %s1420 = scalar_lea.vmem [#allocation2], 12
    %v1421 = vld [vmem:[%s1420] sm:$0xff]
    %v1422 = vld [vmem:[%s1420 + $0x8] sm:$0xf]
    %v1423 = vld [vmem:[%s3] sm:$0xff]
    %v1424 = vld [vmem:[%s53] sm:$0xff]
    %v1427 = vcombine.high %v1415, %v1415
    %v1428 = vcombine.high %v1416, %v1416
    %1429 = vrot.lane.b32.xlu0 %v1415, 127
    %v1430 = vpop.permute.xlu0 %1429
    %1431 = vrot.lane.b32.xlu0 %v1427, 127
    %v1432 = vpop.permute.xlu0 %1431
    %1433 = vrot.lane.b32.xlu0 %v1416, 127
    %v1434 = vpop.permute.xlu0 %1433
    %1435 = vrot.lane.b32.xlu0 %v1428, 127
    %v1436 = vpop.permute.xlu0 %1435
    %v1437 = vsel %vm67, %v1430, %v1432
    %v1438 = vsel %vm67, %v1432, %v1434
    %v1439 = vsel %vm67, %v1434, %v1436
    %v1441 = vsel %vm71, %v1424, 0
    %v1443 = vsel %vm75, %v1437, 0
    %v1445 = vsel %vm75, %v1438, 0
    %v1447 = vsel %vm75, %v1439, 0
    %1449 = vmatprep.subr.mxu0 %v1445
    %1450 = vmatpush1.msra.mxu0 %v1443
    %1451 = vmatprep.subr.mxu0 0.0
    %1452 = vmatpush1.msra.mxu0 0.0
    %1453 = vmatprep.subr.mxu0 0.0
    %1454 = vmatpush1.msra.mxu0 0.0
    %1455 = vmatprep.subr.mxu0 0.0
    %1456 = vmatpush1.msra.mxu0 0.0
    %1457 = vmatprep.subr.mxu0 0.0
    %1458 = vmatpush1.msra.mxu0 0.0
    %1459 = vmatprep.subr.mxu0 0.0
    %1460 = vmatpush1.msra.mxu0 0.0
    %1461 = vmatprep.subr.mxu0 0.0
    %1462 = vmatpush1.msra.mxu0 0.0
    %1463 = vmatprep.subr.mxu0 0.0
    %1464 = vmatpush1.msra.mxu0 0.0
    %1465 = vmatprep.subr.mxu0 0.0
    %1466 = vmatpush1.msra.mxu0 0.0
    %1467 = vmatprep.subr.mxu0 0.0
    %1468 = vmatpush1.msra.mxu0 0.0
    %1469 = vmatprep.subr.mxu0 0.0
    %1470 = vmatpush1.msra.mxu0 0.0
    %1471 = vmatprep.subr.mxu0 0.0
    %1472 = vmatpush1.msra.mxu0 0.0
    %1473 = vmatprep.subr.mxu0 0.0
    %1474 = vmatpush1.msra.mxu0 0.0
    %1475 = vmatprep.subr.mxu0 0.0
    %1476 = vmatpush1.msra.mxu0 0.0
    %1477 = vmatprep.subr.mxu0 0.0
    %1478 = vmatpush1.msra.mxu0 0.0
    %1479 = vmatprep.subr.mxu0 0.0
    %1480 = vmatpush1.msra.mxu0 0.0
    %1481 = vmatprep.subr.mxu0 0.0
    %1482 = vmatpush1.msra.mxu0 0.0
    %1483 = vmatprep.subr.mxu0 0.0
    %1484 = vmatpush1.msra.mxu0 0.0
    %1485 = vmatprep.subr.mxu0 0.0
    %1486 = vmatpush1.msra.mxu0 0.0
    %1487 = vmatprep.subr.mxu0 0.0
    %1488 = vmatpush1.msra.mxu0 0.0
    %1489 = vmatprep.subr.mxu0 0.0
    %1490 = vmatpush1.msra.mxu0 0.0
    %1491 = vmatprep.subr.mxu0 0.0
    %1492 = vmatpush1.msra.mxu0 0.0
    %1493 = vmatprep.subr.mxu0 0.0
    %1494 = vmatpush1.msra.mxu0 0.0
    %1495 = vmatprep.subr.mxu0 0.0
    %1496 = vmatpush1.msra.mxu0 0.0
    %1497 = vmatprep.subr.mxu0 0.0
    %1498 = vmatpush1.msra.mxu0 0.0
    %1499 = vmatprep.subr.mxu0 0.0
    %1500 = vmatpush1.msra.mxu0 0.0
    %1501 = vmatprep.subr.mxu0 0.0
    %1502 = vmatpush1.msra.mxu0 0.0
    %1503 = vmatprep.subr.mxu0 0.0
    %1504 = vmatpush1.msra.mxu0 0.0
    %1505 = vmatprep.subr.mxu0 0.0
    %1506 = vmatpush1.msra.mxu0 0.0
    %1507 = vmatprep.subr.mxu0 0.0
    %1508 = vmatpush1.msra.mxu0 0.0
    %1509 = vmatprep.subr.mxu0 0.0
    %1510 = vmatpush1.msra.mxu0 0.0
    %1511 = vmatprep.subr.mxu0 0.0
    %1512 = vmatpush1.msra.mxu0 0.0
    %1513 = vmatprep.mubr.f32.mxu0 0.0
    %1514 = vmatmul.mubr.f32.gmra.mrb[0].mxu0 %v1441
    %v1515 = vpop.f32.mrb[0].mxu0
    %v1516 = vadd.f32 0.0, %v1515
    %v1517 = vpop.f32.mrb[0].mxu0
    %v1518 = vadd.f32 0.0, %v1517
    %1519 = vdwg.mxu0
    %1520 = vmatprep.subr.mxu0 0.0
    %1521 = vmatpush1.msra.mxu0 %v1447
    %1522 = vmatprep.subr.mxu0 0.0
    %1523 = vmatpush1.msra.mxu0 0.0
    %1524 = vmatprep.subr.mxu0 0.0
    %1525 = vmatpush1.msra.mxu0 0.0
    %1526 = vmatprep.subr.mxu0 0.0
    %1527 = vmatpush1.msra.mxu0 0.0
    %1528 = vmatprep.subr.mxu0 0.0
    %1529 = vmatpush1.msra.mxu0 0.0
    %1530 = vmatprep.subr.mxu0 0.0
    %1531 = vmatpush1.msra.mxu0 0.0
    %1532 = vmatprep.subr.mxu0 0.0
    %1533 = vmatpush1.msra.mxu0 0.0
    %1534 = vmatprep.subr.mxu0 0.0
    %1535 = vmatpush1.msra.mxu0 0.0
    %1536 = vmatprep.subr.mxu0 0.0
    %1537 = vmatpush1.msra.mxu0 0.0
    %1538 = vmatprep.subr.mxu0 0.0
    %1539 = vmatpush1.msra.mxu0 0.0
    %1540 = vmatprep.subr.mxu0 0.0
    %1541 = vmatpush1.msra.mxu0 0.0
    %1542 = vmatprep.subr.mxu0 0.0
    %1543 = vmatpush1.msra.mxu0 0.0
    %1544 = vmatprep.subr.mxu0 0.0
    %1545 = vmatpush1.msra.mxu0 0.0
    %1546 = vmatprep.subr.mxu0 0.0
    %1547 = vmatpush1.msra.mxu0 0.0
    %1548 = vmatprep.subr.mxu0 0.0
    %1549 = vmatpush1.msra.mxu0 0.0
    %1550 = vmatprep.subr.mxu0 0.0
    %1551 = vmatpush1.msra.mxu0 0.0
    %1552 = vmatprep.subr.mxu0 0.0
    %1553 = vmatpush1.msra.mxu0 0.0
    %1554 = vmatprep.subr.mxu0 0.0
    %1555 = vmatpush1.msra.mxu0 0.0
    %1556 = vmatprep.subr.mxu0 0.0
    %1557 = vmatpush1.msra.mxu0 0.0
    %1558 = vmatprep.subr.mxu0 0.0
    %1559 = vmatpush1.msra.mxu0 0.0
    %1560 = vmatprep.subr.mxu0 0.0
    %1561 = vmatpush1.msra.mxu0 0.0
    %1562 = vmatprep.subr.mxu0 0.0
    %1563 = vmatpush1.msra.mxu0 0.0
    %1564 = vmatprep.subr.mxu0 0.0
    %1565 = vmatpush1.msra.mxu0 0.0
    %1566 = vmatprep.subr.mxu0 0.0
    %1567 = vmatpush1.msra.mxu0 0.0
    %1568 = vmatprep.subr.mxu0 0.0
    %1569 = vmatpush1.msra.mxu0 0.0
    %1570 = vmatprep.subr.mxu0 0.0
    %1571 = vmatpush1.msra.mxu0 0.0
    %1572 = vmatprep.subr.mxu0 0.0
    %1573 = vmatpush1.msra.mxu0 0.0
    %1574 = vmatprep.subr.mxu0 0.0
    %1575 = vmatpush1.msra.mxu0 0.0
    %1576 = vmatprep.subr.mxu0 0.0
    %1577 = vmatpush1.msra.mxu0 0.0
    %1578 = vmatprep.subr.mxu0 0.0
    %1579 = vmatpush1.msra.mxu0 0.0
    %1580 = vmatprep.subr.mxu0 0.0
    %1581 = vmatpush1.msra.mxu0 0.0
    %1582 = vmatprep.subr.mxu0 0.0
    %1583 = vmatpush1.msra.mxu0 0.0
    %1584 = vmatprep.mubr.f32.mxu0 0.0
    %1585 = vmatmul.mubr.f32.gmra.mrb[0].mxu0 %v1441
    %v1586 = vpop.f32.mrb[0].mxu0
    %v1587 = vadd.f32 0.0, %v1586
    %v1588 = vpop.f32.mrb[0].mxu0
    %1589 = vdwg.mxu0
    %v1591 = vsel %vm71, %v1423, 0
    %v1593 = vsel %vm75, %v1415, 0
    %v1595 = vsel %vm75, %v1427, 0
    %v1597 = vsel %vm75, %v1416, 0
    %1599 = vmatprep.subr.mxu0 %v1595
    %1600 = vmatpush1.msra.mxu0 %v1593
    %1601 = vmatprep.subr.mxu0 0.0
    %1602 = vmatpush1.msra.mxu0 0.0
    %1603 = vmatprep.subr.mxu0 0.0
    %1604 = vmatpush1.msra.mxu0 0.0
    %1605 = vmatprep.subr.mxu0 0.0
    %1606 = vmatpush1.msra.mxu0 0.0
    %1607 = vmatprep.subr.mxu0 0.0
    %1608 = vmatpush1.msra.mxu0 0.0
    %1609 = vmatprep.subr.mxu0 0.0
    %1610 = vmatpush1.msra.mxu0 0.0
    %1611 = vmatprep.subr.mxu0 0.0
    %1612 = vmatpush1.msra.mxu0 0.0
    %1613 = vmatprep.subr.mxu0 0.0
    %1614 = vmatpush1.msra.mxu0 0.0
    %1615 = vmatprep.subr.mxu0 0.0
    %1616 = vmatpush1.msra.mxu0 0.0
    %1617 = vmatprep.subr.mxu0 0.0
    %1618 = vmatpush1.msra.mxu0 0.0
    %1619 = vmatprep.subr.mxu0 0.0
    %1620 = vmatpush1.msra.mxu0 0.0
    %1621 = vmatprep.subr.mxu0 0.0
    %1622 = vmatpush1.msra.mxu0 0.0
    %1623 = vmatprep.subr.mxu0 0.0
    %1624 = vmatpush1.msra.mxu0 0.0
    %1625 = vmatprep.subr.mxu0 0.0
    %1626 = vmatpush1.msra.mxu0 0.0
    %1627 = vmatprep.subr.mxu0 0.0
    %1628 = vmatpush1.msra.mxu0 0.0
    %1629 = vmatprep.subr.mxu0 0.0
    %1630 = vmatpush1.msra.mxu0 0.0
    %1631 = vmatprep.subr.mxu0 0.0
    %1632 = vmatpush1.msra.mxu0 0.0
    %1633 = vmatprep.subr.mxu0 0.0
    %1634 = vmatpush1.msra.mxu0 0.0
    %1635 = vmatprep.subr.mxu0 0.0
    %1636 = vmatpush1.msra.mxu0 0.0
    %1637 = vmatprep.subr.mxu0 0.0
    %1638 = vmatpush1.msra.mxu0 0.0
    %1639 = vmatprep.subr.mxu0 0.0
    %1640 = vmatpush1.msra.mxu0 0.0
    %1641 = vmatprep.subr.mxu0 0.0
    %1642 = vmatpush1.msra.mxu0 0.0
    %1643 = vmatprep.subr.mxu0 0.0
    %1644 = vmatpush1.msra.mxu0 0.0
    %1645 = vmatprep.subr.mxu0 0.0
    %1646 = vmatpush1.msra.mxu0 0.0
    %1647 = vmatprep.subr.mxu0 0.0
    %1648 = vmatpush1.msra.mxu0 0.0
    %1649 = vmatprep.subr.mxu0 0.0
    %1650 = vmatpush1.msra.mxu0 0.0
    %1651 = vmatprep.subr.mxu0 0.0
    %1652 = vmatpush1.msra.mxu0 0.0
    %1653 = vmatprep.subr.mxu0 0.0
    %1654 = vmatpush1.msra.mxu0 0.0
    %1655 = vmatprep.subr.mxu0 0.0
    %1656 = vmatpush1.msra.mxu0 0.0
    %1657 = vmatprep.subr.mxu0 0.0
    %1658 = vmatpush1.msra.mxu0 0.0
    %1659 = vmatprep.subr.mxu0 0.0
    %1660 = vmatpush1.msra.mxu0 0.0
    %1661 = vmatprep.subr.mxu0 0.0
    %1662 = vmatpush1.msra.mxu0 0.0
    %1663 = vmatprep.mubr.f32.mxu0 0.0
    %1664 = vmatmul.mubr.f32.gmra.mrb[0].mxu0 %v1591
    %v1665 = vpop.f32.mrb[0].mxu0
    %v1666 = vadd.f32 %v1516, %v1665
    %v1667 = vpop.f32.mrb[0].mxu0
    %v1668 = vadd.f32 %v1518, %v1667
    %1669 = vdwg.mxu0
    %1670 = vmatprep.subr.mxu0 0.0
    %1671 = vmatpush1.msra.mxu0 %v1597
    %1672 = vmatprep.subr.mxu0 0.0
    %1673 = vmatpush1.msra.mxu0 0.0
    %1674 = vmatprep.subr.mxu0 0.0
    %1675 = vmatpush1.msra.mxu0 0.0
    %1676 = vmatprep.subr.mxu0 0.0
    %1677 = vmatpush1.msra.mxu0 0.0
    %1678 = vmatprep.subr.mxu0 0.0
    %1679 = vmatpush1.msra.mxu0 0.0
    %1680 = vmatprep.subr.mxu0 0.0
    %1681 = vmatpush1.msra.mxu0 0.0
    %1682 = vmatprep.subr.mxu0 0.0
    %1683 = vmatpush1.msra.mxu0 0.0
    %1684 = vmatprep.subr.mxu0 0.0
    %1685 = vmatpush1.msra.mxu0 0.0
    %1686 = vmatprep.subr.mxu0 0.0
    %1687 = vmatpush1.msra.mxu0 0.0
    %1688 = vmatprep.subr.mxu0 0.0
    %1689 = vmatpush1.msra.mxu0 0.0
    %1690 = vmatprep.subr.mxu0 0.0
    %1691 = vmatpush1.msra.mxu0 0.0
    %1692 = vmatprep.subr.mxu0 0.0
    %1693 = vmatpush1.msra.mxu0 0.0
    %1694 = vmatprep.subr.mxu0 0.0
    %1695 = vmatpush1.msra.mxu0 0.0
    %1696 = vmatprep.subr.mxu0 0.0
    %1697 = vmatpush1.msra.mxu0 0.0
    %1698 = vmatprep.subr.mxu0 0.0
    %1699 = vmatpush1.msra.mxu0 0.0
    %1700 = vmatprep.subr.mxu0 0.0
    %1701 = vmatpush1.msra.mxu0 0.0
    %1702 = vmatprep.subr.mxu0 0.0
    %1703 = vmatpush1.msra.mxu0 0.0
    %1704 = vmatprep.subr.mxu0 0.0
    %1705 = vmatpush1.msra.mxu0 0.0
    %1706 = vmatprep.subr.mxu0 0.0
    %1707 = vmatpush1.msra.mxu0 0.0
    %1708 = vmatprep.subr.mxu0 0.0
    %1709 = vmatpush1.msra.mxu0 0.0
    %1710 = vmatprep.subr.mxu0 0.0
    %1711 = vmatpush1.msra.mxu0 0.0
    %1712 = vmatprep.subr.mxu0 0.0
    %1713 = vmatpush1.msra.mxu0 0.0
    %1714 = vmatprep.subr.mxu0 0.0
    %1715 = vmatpush1.msra.mxu0 0.0
    %1716 = vmatprep.subr.mxu0 0.0
    %1717 = vmatpush1.msra.mxu0 0.0
    %1718 = vmatprep.subr.mxu0 0.0
    %1719 = vmatpush1.msra.mxu0 0.0
    %1720 = vmatprep.subr.mxu0 0.0
    %1721 = vmatpush1.msra.mxu0 0.0
    %1722 = vmatprep.subr.mxu0 0.0
    %1723 = vmatpush1.msra.mxu0 0.0
    %1724 = vmatprep.subr.mxu0 0.0
    %1725 = vmatpush1.msra.mxu0 0.0
    %1726 = vmatprep.subr.mxu0 0.0
    %1727 = vmatpush1.msra.mxu0 0.0
    %1728 = vmatprep.subr.mxu0 0.0
    %1729 = vmatpush1.msra.mxu0 0.0
    %1730 = vmatprep.subr.mxu0 0.0
    %1731 = vmatpush1.msra.mxu0 0.0
    %1732 = vmatprep.subr.mxu0 0.0
    %1733 = vmatpush1.msra.mxu0 0.0
    %1734 = vmatprep.mubr.f32.mxu0 0.0
    %1735 = vmatmul.mubr.f32.gmra.mrb[0].mxu0 %v1591
    %v1736 = vpop.f32.mrb[0].mxu0
    %v1737 = vadd.f32 %v1587, %v1736
    %v1738 = vpop.f32.mrb[0].mxu0
    %1739 = vdwg.mxu0
    %v1740 = vld [vmem:[%s373] sm:$0xff]
    %1741 = vrot.lane.b32.xlu0 %v1415, 126
    %v1742 = vpop.permute.xlu0 %1741
    %1743 = vrot.lane.b32.xlu0 %v1427, 126
    %v1744 = vpop.permute.xlu0 %1743
    %1745 = vrot.lane.b32.xlu0 %v1416, 126
    %v1746 = vpop.permute.xlu0 %1745
    %1747 = vrot.lane.b32.xlu0 %v1428, 126
    %v1748 = vpop.permute.xlu0 %1747
    %v1749 = vsel %vm383, %v1742, %v1744
    %v1750 = vsel %vm383, %v1744, %v1746
    %v1751 = vsel %vm383, %v1746, %v1748
    %v1753 = vsel %vm71, %v1740, 0
    %v1755 = vsel %vm75, %v1749, 0
    %v1757 = vsel %vm75, %v1750, 0
    %v1759 = vsel %vm75, %v1751, 0
    %1761 = vmatprep.subr.mxu0 %v1757
    %1762 = vmatpush1.msra.mxu0 %v1755
    %1763 = vmatprep.subr.mxu0 0.0
    %1764 = vmatpush1.msra.mxu0 0.0
    %1765 = vmatprep.subr.mxu0 0.0
    %1766 = vmatpush1.msra.mxu0 0.0
    %1767 = vmatprep.subr.mxu0 0.0
    %1768 = vmatpush1.msra.mxu0 0.0
    %1769 = vmatprep.subr.mxu0 0.0
    %1770 = vmatpush1.msra.mxu0 0.0
    %1771 = vmatprep.subr.mxu0 0.0
    %1772 = vmatpush1.msra.mxu0 0.0
    %1773 = vmatprep.subr.mxu0 0.0
    %1774 = vmatpush1.msra.mxu0 0.0
    %1775 = vmatprep.subr.mxu0 0.0
    %1776 = vmatpush1.msra.mxu0 0.0
    %1777 = vmatprep.subr.mxu0 0.0
    %1778 = vmatpush1.msra.mxu0 0.0
    %1779 = vmatprep.subr.mxu0 0.0
    %1780 = vmatpush1.msra.mxu0 0.0
    %1781 = vmatprep.subr.mxu0 0.0
    %1782 = vmatpush1.msra.mxu0 0.0
    %1783 = vmatprep.subr.mxu0 0.0
    %1784 = vmatpush1.msra.mxu0 0.0
    %1785 = vmatprep.subr.mxu0 0.0
    %1786 = vmatpush1.msra.mxu0 0.0
    %1787 = vmatprep.subr.mxu0 0.0
    %1788 = vmatpush1.msra.mxu0 0.0
    %1789 = vmatprep.subr.mxu0 0.0
    %1790 = vmatpush1.msra.mxu0 0.0
    %1791 = vmatprep.subr.mxu0 0.0
    %1792 = vmatpush1.msra.mxu0 0.0
    %1793 = vmatprep.subr.mxu0 0.0
    %1794 = vmatpush1.msra.mxu0 0.0
    %1795 = vmatprep.subr.mxu0 0.0
    %1796 = vmatpush1.msra.mxu0 0.0
    %1797 = vmatprep.subr.mxu0 0.0
    %1798 = vmatpush1.msra.mxu0 0.0
    %1799 = vmatprep.subr.mxu0 0.0
    %1800 = vmatpush1.msra.mxu0 0.0
    %1801 = vmatprep.subr.mxu0 0.0
    %1802 = vmatpush1.msra.mxu0 0.0
    %1803 = vmatprep.subr.mxu0 0.0
    %1804 = vmatpush1.msra.mxu0 0.0
    %1805 = vmatprep.subr.mxu0 0.0
    %1806 = vmatpush1.msra.mxu0 0.0
    %1807 = vmatprep.subr.mxu0 0.0
    %1808 = vmatpush1.msra.mxu0 0.0
    %1809 = vmatprep.subr.mxu0 0.0
    %1810 = vmatpush1.msra.mxu0 0.0
    %1811 = vmatprep.subr.mxu0 0.0
    %1812 = vmatpush1.msra.mxu0 0.0
    %1813 = vmatprep.subr.mxu0 0.0
    %1814 = vmatpush1.msra.mxu0 0.0
    %1815 = vmatprep.subr.mxu0 0.0
    %1816 = vmatpush1.msra.mxu0 0.0
    %1817 = vmatprep.subr.mxu0 0.0
    %1818 = vmatpush1.msra.mxu0 0.0
    %1819 = vmatprep.subr.mxu0 0.0
    %1820 = vmatpush1.msra.mxu0 0.0
    %1821 = vmatprep.subr.mxu0 0.0
    %1822 = vmatpush1.msra.mxu0 0.0
    %1823 = vmatprep.subr.mxu0 0.0
    %1824 = vmatpush1.msra.mxu0 0.0
    %1825 = vmatprep.mubr.f32.mxu0 0.0
    %1826 = vmatmul.mubr.f32.gmra.mrb[0].mxu0 %v1753
    %v1827 = vpop.f32.mrb[0].mxu0
    %v1828 = vadd.f32 0.0, %v1827
    %v1829 = vpop.f32.mrb[0].mxu0
    %v1830 = vadd.f32 0.0, %v1829
    %1831 = vdwg.mxu0
    %1832 = vmatprep.subr.mxu0 0.0
    %1833 = vmatpush1.msra.mxu0 %v1759
    %1834 = vmatprep.subr.mxu0 0.0
    %1835 = vmatpush1.msra.mxu0 0.0
    %1836 = vmatprep.subr.mxu0 0.0
    %1837 = vmatpush1.msra.mxu0 0.0
    %1838 = vmatprep.subr.mxu0 0.0
    %1839 = vmatpush1.msra.mxu0 0.0
    %1840 = vmatprep.subr.mxu0 0.0
    %1841 = vmatpush1.msra.mxu0 0.0
    %1842 = vmatprep.subr.mxu0 0.0
    %1843 = vmatpush1.msra.mxu0 0.0
    %1844 = vmatprep.subr.mxu0 0.0
    %1845 = vmatpush1.msra.mxu0 0.0
    %1846 = vmatprep.subr.mxu0 0.0
    %1847 = vmatpush1.msra.mxu0 0.0
    %1848 = vmatprep.subr.mxu0 0.0
    %1849 = vmatpush1.msra.mxu0 0.0
    %1850 = vmatprep.subr.mxu0 0.0
    %1851 = vmatpush1.msra.mxu0 0.0
    %1852 = vmatprep.subr.mxu0 0.0
    %1853 = vmatpush1.msra.mxu0 0.0
    %1854 = vmatprep.subr.mxu0 0.0
    %1855 = vmatpush1.msra.mxu0 0.0
    %1856 = vmatprep.subr.mxu0 0.0
    %1857 = vmatpush1.msra.mxu0 0.0
    %1858 = vmatprep.subr.mxu0 0.0
    %1859 = vmatpush1.msra.mxu0 0.0
    %1860 = vmatprep.subr.mxu0 0.0
    %1861 = vmatpush1.msra.mxu0 0.0
    %1862 = vmatprep.subr.mxu0 0.0
    %1863 = vmatpush1.msra.mxu0 0.0
    %1864 = vmatprep.subr.mxu0 0.0
    %1865 = vmatpush1.msra.mxu0 0.0
    %1866 = vmatprep.subr.mxu0 0.0
    %1867 = vmatpush1.msra.mxu0 0.0
    %1868 = vmatprep.subr.mxu0 0.0
    %1869 = vmatpush1.msra.mxu0 0.0
    %1870 = vmatprep.subr.mxu0 0.0
    %1871 = vmatpush1.msra.mxu0 0.0
    %1872 = vmatprep.subr.mxu0 0.0
    %1873 = vmatpush1.msra.mxu0 0.0
    %1874 = vmatprep.subr.mxu0 0.0
    %1875 = vmatpush1.msra.mxu0 0.0
    %1876 = vmatprep.subr.mxu0 0.0
    %1877 = vmatpush1.msra.mxu0 0.0
    %1878 = vmatprep.subr.mxu0 0.0
    %1879 = vmatpush1.msra.mxu0 0.0
    %1880 = vmatprep.subr.mxu0 0.0
    %1881 = vmatpush1.msra.mxu0 0.0
    %1882 = vmatprep.subr.mxu0 0.0
    %1883 = vmatpush1.msra.mxu0 0.0
    %1884 = vmatprep.subr.mxu0 0.0
    %1885 = vmatpush1.msra.mxu0 0.0
    %1886 = vmatprep.subr.mxu0 0.0
    %1887 = vmatpush1.msra.mxu0 0.0
    %1888 = vmatprep.subr.mxu0 0.0
    %1889 = vmatpush1.msra.mxu0 0.0
    %1890 = vmatprep.subr.mxu0 0.0
    %1891 = vmatpush1.msra.mxu0 0.0
    %1892 = vmatprep.subr.mxu0 0.0
    %1893 = vmatpush1.msra.mxu0 0.0
    %1894 = vmatprep.subr.mxu0 0.0
    %1895 = vmatpush1.msra.mxu0 0.0
    %1896 = vmatprep.mubr.f32.mxu0 0.0
    %1897 = vmatmul.mubr.f32.gmra.mrb[0].mxu0 %v1753
    %v1898 = vpop.f32.mrb[0].mxu0
    %v1899 = vadd.f32 0.0, %v1898
    %v1900 = vpop.f32.mrb[0].mxu0
    %1901 = vdwg.mxu0
    %v1902 = vadd.f32 %v1666, %v1828
    %v1903 = vadd.f32 %v1668, %v1830
    %v1904 = vadd.f32 %v1737, %v1899
    %v1905 = vadd.f32 %v1902, %v543
    %v1906 = vadd.f32 %v1903, %v543
    %v1907 = vadd.f32 %v1904, %v543
    %v1908 = vld [vmem:[%s548] sm:$0xff]
    %v1909 = vld [vmem:[%s550] sm:$0xff]
    %v1912 = vcombine.high %v1418, %v1418
    %v1913 = vcombine.high %v1419, %v1419
    %1914 = vrot.lane.b32.xlu0 %v1418, 127
    %v1915 = vpop.permute.xlu0 %1914
    %1916 = vrot.lane.b32.xlu0 %v1912, 127
    %v1917 = vpop.permute.xlu0 %1916
    %1918 = vrot.lane.b32.xlu0 %v1419, 127
    %v1919 = vpop.permute.xlu0 %1918
    %1920 = vrot.lane.b32.xlu0 %v1913, 127
    %v1921 = vpop.permute.xlu0 %1920
    %v1922 = vsel %vm67, %v1915, %v1917
    %v1923 = vsel %vm67, %v1917, %v1919
    %v1924 = vsel %vm67, %v1919, %v1921
    %v1926 = vsel %vm71, %v1909, 0
    %v1928 = vsel %vm75, %v1922, 0
    %v1930 = vsel %vm75, %v1923, 0
    %v1932 = vsel %vm75, %v1924, 0
    %1934 = vmatprep.subr.mxu0 %v1930
    %1935 = vmatpush1.msra.mxu0 %v1928
    %1936 = vmatprep.subr.mxu0 0.0
    %1937 = vmatpush1.msra.mxu0 0.0
    %1938 = vmatprep.subr.mxu0 0.0
    %1939 = vmatpush1.msra.mxu0 0.0
    %1940 = vmatprep.subr.mxu0 0.0
    %1941 = vmatpush1.msra.mxu0 0.0
    %1942 = vmatprep.subr.mxu0 0.0
    %1943 = vmatpush1.msra.mxu0 0.0
    %1944 = vmatprep.subr.mxu0 0.0
    %1945 = vmatpush1.msra.mxu0 0.0
    %1946 = vmatprep.subr.mxu0 0.0
    %1947 = vmatpush1.msra.mxu0 0.0
    %1948 = vmatprep.subr.mxu0 0.0
    %1949 = vmatpush1.msra.mxu0 0.0
    %1950 = vmatprep.subr.mxu0 0.0
    %1951 = vmatpush1.msra.mxu0 0.0
    %1952 = vmatprep.subr.mxu0 0.0
    %1953 = vmatpush1.msra.mxu0 0.0
    %1954 = vmatprep.subr.mxu0 0.0
    %1955 = vmatpush1.msra.mxu0 0.0
    %1956 = vmatprep.subr.mxu0 0.0
    %1957 = vmatpush1.msra.mxu0 0.0
    %1958 = vmatprep.subr.mxu0 0.0
    %1959 = vmatpush1.msra.mxu0 0.0
    %1960 = vmatprep.subr.mxu0 0.0
    %1961 = vmatpush1.msra.mxu0 0.0
    %1962 = vmatprep.subr.mxu0 0.0
    %1963 = vmatpush1.msra.mxu0 0.0
    %1964 = vmatprep.subr.mxu0 0.0
    %1965 = vmatpush1.msra.mxu0 0.0
    %1966 = vmatprep.subr.mxu0 0.0
    %1967 = vmatpush1.msra.mxu0 0.0
    %1968 = vmatprep.subr.mxu0 0.0
    %1969 = vmatpush1.msra.mxu0 0.0
    %1970 = vmatprep.subr.mxu0 0.0
    %1971 = vmatpush1.msra.mxu0 0.0
    %1972 = vmatprep.subr.mxu0 0.0
    %1973 = vmatpush1.msra.mxu0 0.0
    %1974 = vmatprep.subr.mxu0 0.0
    %1975 = vmatpush1.msra.mxu0 0.0
    %1976 = vmatprep.subr.mxu0 0.0
    %1977 = vmatpush1.msra.mxu0 0.0
    %1978 = vmatprep.subr.mxu0 0.0
    %1979 = vmatpush1.msra.mxu0 0.0
    %1980 = vmatprep.subr.mxu0 0.0
    %1981 = vmatpush1.msra.mxu0 0.0
    %1982 = vmatprep.subr.mxu0 0.0
    %1983 = vmatpush1.msra.mxu0 0.0
    %1984 = vmatprep.subr.mxu0 0.0
    %1985 = vmatpush1.msra.mxu0 0.0
    %1986 = vmatprep.subr.mxu0 0.0
    %1987 = vmatpush1.msra.mxu0 0.0
    %1988 = vmatprep.subr.mxu0 0.0
    %1989 = vmatpush1.msra.mxu0 0.0
    %1990 = vmatprep.subr.mxu0 0.0
    %1991 = vmatpush1.msra.mxu0 0.0
    %1992 = vmatprep.subr.mxu0 0.0
    %1993 = vmatpush1.msra.mxu0 0.0
    %1994 = vmatprep.subr.mxu0 0.0
    %1995 = vmatpush1.msra.mxu0 0.0
    %1996 = vmatprep.subr.mxu0 0.0
    %1997 = vmatpush1.msra.mxu0 0.0
    %1998 = vmatprep.mubr.f32.mxu0 0.0
    %1999 = vmatmul.mubr.f32.gmra.mrb[0].mxu0 %v1926
    %v2000 = vpop.f32.mrb[0].mxu0
    %v2001 = vadd.f32 0.0, %v2000
    %v2002 = vpop.f32.mrb[0].mxu0
    %v2003 = vadd.f32 0.0, %v2002
    %2004 = vdwg.mxu0
    %2005 = vmatprep.subr.mxu0 0.0
    %2006 = vmatpush1.msra.mxu0 %v1932
    %2007 = vmatprep.subr.mxu0 0.0
    %2008 = vmatpush1.msra.mxu0 0.0
    %2009 = vmatprep.subr.mxu0 0.0
    %2010 = vmatpush1.msra.mxu0 0.0
    %2011 = vmatprep.subr.mxu0 0.0
    %2012 = vmatpush1.msra.mxu0 0.0
    %2013 = vmatprep.subr.mxu0 0.0
    %2014 = vmatpush1.msra.mxu0 0.0
    %2015 = vmatprep.subr.mxu0 0.0
    %2016 = vmatpush1.msra.mxu0 0.0
    %2017 = vmatprep.subr.mxu0 0.0
    %2018 = vmatpush1.msra.mxu0 0.0
    %2019 = vmatprep.subr.mxu0 0.0
    %2020 = vmatpush1.msra.mxu0 0.0
    %2021 = vmatprep.subr.mxu0 0.0
    %2022 = vmatpush1.msra.mxu0 0.0
    %2023 = vmatprep.subr.mxu0 0.0
    %2024 = vmatpush1.msra.mxu0 0.0
    %2025 = vmatprep.subr.mxu0 0.0
    %2026 = vmatpush1.msra.mxu0 0.0
    %2027 = vmatprep.subr.mxu0 0.0
    %2028 = vmatpush1.msra.mxu0 0.0
    %2029 = vmatprep.subr.mxu0 0.0
    %2030 = vmatpush1.msra.mxu0 0.0
    %2031 = vmatprep.subr.mxu0 0.0
    %2032 = vmatpush1.msra.mxu0 0.0
    %2033 = vmatprep.subr.mxu0 0.0
    %2034 = vmatpush1.msra.mxu0 0.0
    %2035 = vmatprep.subr.mxu0 0.0
    %2036 = vmatpush1.msra.mxu0 0.0
    %2037 = vmatprep.subr.mxu0 0.0
    %2038 = vmatpush1.msra.mxu0 0.0
    %2039 = vmatprep.subr.mxu0 0.0
    %2040 = vmatpush1.msra.mxu0 0.0
    %2041 = vmatprep.subr.mxu0 0.0
    %2042 = vmatpush1.msra.mxu0 0.0
    %2043 = vmatprep.subr.mxu0 0.0
    %2044 = vmatpush1.msra.mxu0 0.0
    %2045 = vmatprep.subr.mxu0 0.0
    %2046 = vmatpush1.msra.mxu0 0.0
    %2047 = vmatprep.subr.mxu0 0.0
    %2048 = vmatpush1.msra.mxu0 0.0
    %2049 = vmatprep.subr.mxu0 0.0
    %2050 = vmatpush1.msra.mxu0 0.0
    %2051 = vmatprep.subr.mxu0 0.0
    %2052 = vmatpush1.msra.mxu0 0.0
    %2053 = vmatprep.subr.mxu0 0.0
    %2054 = vmatpush1.msra.mxu0 0.0
    %2055 = vmatprep.subr.mxu0 0.0
    %2056 = vmatpush1.msra.mxu0 0.0
    %2057 = vmatprep.subr.mxu0 0.0
    %2058 = vmatpush1.msra.mxu0 0.0
    %2059 = vmatprep.subr.mxu0 0.0
    %2060 = vmatpush1.msra.mxu0 0.0
    %2061 = vmatprep.subr.mxu0 0.0
    %2062 = vmatpush1.msra.mxu0 0.0
    %2063 = vmatprep.subr.mxu0 0.0
    %2064 = vmatpush1.msra.mxu0 0.0
    %2065 = vmatprep.subr.mxu0 0.0
    %2066 = vmatpush1.msra.mxu0 0.0
    %2067 = vmatprep.subr.mxu0 0.0
    %2068 = vmatpush1.msra.mxu0 0.0
    %2069 = vmatprep.mubr.f32.mxu0 0.0
    %2070 = vmatmul.mubr.f32.gmra.mrb[0].mxu0 %v1926
    %v2071 = vpop.f32.mrb[0].mxu0
    %v2072 = vadd.f32 0.0, %v2071
    %v2073 = vpop.f32.mrb[0].mxu0
    %2074 = vdwg.mxu0
    %v2076 = vsel %vm71, %v1908, 0
    %v2078 = vsel %vm75, %v1418, 0
    %v2080 = vsel %vm75, %v1912, 0
    %v2082 = vsel %vm75, %v1419, 0
    %2084 = vmatprep.subr.mxu0 %v2080
    %2085 = vmatpush1.msra.mxu0 %v2078
    %2086 = vmatprep.subr.mxu0 0.0
    %2087 = vmatpush1.msra.mxu0 0.0
    %2088 = vmatprep.subr.mxu0 0.0
    %2089 = vmatpush1.msra.mxu0 0.0
    %2090 = vmatprep.subr.mxu0 0.0
    %2091 = vmatpush1.msra.mxu0 0.0
    %2092 = vmatprep.subr.mxu0 0.0
    %2093 = vmatpush1.msra.mxu0 0.0
    %2094 = vmatprep.subr.mxu0 0.0
    %2095 = vmatpush1.msra.mxu0 0.0
    %2096 = vmatprep.subr.mxu0 0.0
    %2097 = vmatpush1.msra.mxu0 0.0
    %2098 = vmatprep.subr.mxu0 0.0
    %2099 = vmatpush1.msra.mxu0 0.0
    %2100 = vmatprep.subr.mxu0 0.0
    %2101 = vmatpush1.msra.mxu0 0.0
    %2102 = vmatprep.subr.mxu0 0.0
    %2103 = vmatpush1.msra.mxu0 0.0
    %2104 = vmatprep.subr.mxu0 0.0
    %2105 = vmatpush1.msra.mxu0 0.0
    %2106 = vmatprep.subr.mxu0 0.0
    %2107 = vmatpush1.msra.mxu0 0.0
    %2108 = vmatprep.subr.mxu0 0.0
    %2109 = vmatpush1.msra.mxu0 0.0
    %2110 = vmatprep.subr.mxu0 0.0
    %2111 = vmatpush1.msra.mxu0 0.0
    %2112 = vmatprep.subr.mxu0 0.0
    %2113 = vmatpush1.msra.mxu0 0.0
    %2114 = vmatprep.subr.mxu0 0.0
    %2115 = vmatpush1.msra.mxu0 0.0
    %2116 = vmatprep.subr.mxu0 0.0
    %2117 = vmatpush1.msra.mxu0 0.0
    %2118 = vmatprep.subr.mxu0 0.0
    %2119 = vmatpush1.msra.mxu0 0.0
    %2120 = vmatprep.subr.mxu0 0.0
    %2121 = vmatpush1.msra.mxu0 0.0
    %2122 = vmatprep.subr.mxu0 0.0
    %2123 = vmatpush1.msra.mxu0 0.0
    %2124 = vmatprep.subr.mxu0 0.0
    %2125 = vmatpush1.msra.mxu0 0.0
    %2126 = vmatprep.subr.mxu0 0.0
    %2127 = vmatpush1.msra.mxu0 0.0
    %2128 = vmatprep.subr.mxu0 0.0
    %2129 = vmatpush1.msra.mxu0 0.0
    %2130 = vmatprep.subr.mxu0 0.0
    %2131 = vmatpush1.msra.mxu0 0.0
    %2132 = vmatprep.subr.mxu0 0.0
    %2133 = vmatpush1.msra.mxu0 0.0
    %2134 = vmatprep.subr.mxu0 0.0
    %2135 = vmatpush1.msra.mxu0 0.0
    %2136 = vmatprep.subr.mxu0 0.0
    %2137 = vmatpush1.msra.mxu0 0.0
    %2138 = vmatprep.subr.mxu0 0.0
    %2139 = vmatpush1.msra.mxu0 0.0
    %2140 = vmatprep.subr.mxu0 0.0
    %2141 = vmatpush1.msra.mxu0 0.0
    %2142 = vmatprep.subr.mxu0 0.0
    %2143 = vmatpush1.msra.mxu0 0.0
    %2144 = vmatprep.subr.mxu0 0.0
    %2145 = vmatpush1.msra.mxu0 0.0
    %2146 = vmatprep.subr.mxu0 0.0
    %2147 = vmatpush1.msra.mxu0 0.0
    %2148 = vmatprep.mubr.f32.mxu0 0.0
    %2149 = vmatmul.mubr.f32.gmra.mrb[0].mxu0 %v2076
    %v2150 = vpop.f32.mrb[0].mxu0
    %v2151 = vadd.f32 %v2001, %v2150
    %v2152 = vpop.f32.mrb[0].mxu0
    %v2153 = vadd.f32 %v2003, %v2152
    %2154 = vdwg.mxu0
    %2155 = vmatprep.subr.mxu0 0.0
    %2156 = vmatpush1.msra.mxu0 %v2082
    %2157 = vmatprep.subr.mxu0 0.0
    %2158 = vmatpush1.msra.mxu0 0.0
    %2159 = vmatprep.subr.mxu0 0.0
    %2160 = vmatpush1.msra.mxu0 0.0
    %2161 = vmatprep.subr.mxu0 0.0
    %2162 = vmatpush1.msra.mxu0 0.0
    %2163 = vmatprep.subr.mxu0 0.0
    %2164 = vmatpush1.msra.mxu0 0.0
    %2165 = vmatprep.subr.mxu0 0.0
    %2166 = vmatpush1.msra.mxu0 0.0
    %2167 = vmatprep.subr.mxu0 0.0
    %2168 = vmatpush1.msra.mxu0 0.0
    %2169 = vmatprep.subr.mxu0 0.0
    %2170 = vmatpush1.msra.mxu0 0.0
    %2171 = vmatprep.subr.mxu0 0.0
    %2172 = vmatpush1.msra.mxu0 0.0
    %2173 = vmatprep.subr.mxu0 0.0
    %2174 = vmatpush1.msra.mxu0 0.0
    %2175 = vmatprep.subr.mxu0 0.0
    %2176 = vmatpush1.msra.mxu0 0.0
    %2177 = vmatprep.subr.mxu0 0.0
    %2178 = vmatpush1.msra.mxu0 0.0
    %2179 = vmatprep.subr.mxu0 0.0
    %2180 = vmatpush1.msra.mxu0 0.0
    %2181 = vmatprep.subr.mxu0 0.0
    %2182 = vmatpush1.msra.mxu0 0.0
    %2183 = vmatprep.subr.mxu0 0.0
    %2184 = vmatpush1.msra.mxu0 0.0
    %2185 = vmatprep.subr.mxu0 0.0
    %2186 = vmatpush1.msra.mxu0 0.0
    %2187 = vmatprep.subr.mxu0 0.0
    %2188 = vmatpush1.msra.mxu0 0.0
    %2189 = vmatprep.subr.mxu0 0.0
    %2190 = vmatpush1.msra.mxu0 0.0
    %2191 = vmatprep.subr.mxu0 0.0
    %2192 = vmatpush1.msra.mxu0 0.0
    %2193 = vmatprep.subr.mxu0 0.0
    %2194 = vmatpush1.msra.mxu0 0.0
    %2195 = vmatprep.subr.mxu0 0.0
    %2196 = vmatpush1.msra.mxu0 0.0
    %2197 = vmatprep.subr.mxu0 0.0
    %2198 = vmatpush1.msra.mxu0 0.0
    %2199 = vmatprep.subr.mxu0 0.0
    %2200 = vmatpush1.msra.mxu0 0.0
    %2201 = vmatprep.subr.mxu0 0.0
    %2202 = vmatpush1.msra.mxu0 0.0
    %2203 = vmatprep.subr.mxu0 0.0
    %2204 = vmatpush1.msra.mxu0 0.0
    %2205 = vmatprep.subr.mxu0 0.0
    %2206 = vmatpush1.msra.mxu0 0.0
    %2207 = vmatprep.subr.mxu0 0.0
    %2208 = vmatpush1.msra.mxu0 0.0
    %2209 = vmatprep.subr.mxu0 0.0
    %2210 = vmatpush1.msra.mxu0 0.0
    %2211 = vmatprep.subr.mxu0 0.0
    %2212 = vmatpush1.msra.mxu0 0.0
    %2213 = vmatprep.subr.mxu0 0.0
    %2214 = vmatpush1.msra.mxu0 0.0
    %2215 = vmatprep.subr.mxu0 0.0
    %2216 = vmatpush1.msra.mxu0 0.0
    %2217 = vmatprep.subr.mxu0 0.0
    %2218 = vmatpush1.msra.mxu0 0.0
    %2219 = vmatprep.mubr.f32.mxu0 0.0
    %2220 = vmatmul.mubr.f32.gmra.mrb[0].mxu0 %v2076
    %v2221 = vpop.f32.mrb[0].mxu0
    %v2222 = vadd.f32 %v2072, %v2221
    %v2223 = vpop.f32.mrb[0].mxu0
    %2224 = vdwg.mxu0
    %2225 = vmatprep.subr.mxu0 %v1906
    %2226 = vmatpush1.msra.mxu0 %v1905
    %2227 = vmatprep.subr.mxu0 0.0
    %2228 = vmatpush1.msra.mxu0 0.0
    %2229 = vmatprep.subr.mxu0 0.0
    %2230 = vmatpush1.msra.mxu0 0.0
    %2231 = vmatprep.subr.mxu0 0.0
    %2232 = vmatpush1.msra.mxu0 0.0
    %2233 = vmatprep.subr.mxu0 0.0
    %2234 = vmatpush1.msra.mxu0 0.0
    %2235 = vmatprep.subr.mxu0 0.0
    %2236 = vmatpush1.msra.mxu0 0.0
    %2237 = vmatprep.subr.mxu0 0.0
    %2238 = vmatpush1.msra.mxu0 0.0
    %2239 = vmatprep.subr.mxu0 0.0
    %2240 = vmatpush1.msra.mxu0 0.0
    %2241 = vmatprep.subr.mxu0 0.0
    %2242 = vmatpush1.msra.mxu0 0.0
    %2243 = vmatprep.subr.mxu0 0.0
    %2244 = vmatpush1.msra.mxu0 0.0
    %2245 = vmatprep.subr.mxu0 0.0
    %2246 = vmatpush1.msra.mxu0 0.0
    %2247 = vmatprep.subr.mxu0 0.0
    %2248 = vmatpush1.msra.mxu0 0.0
    %2249 = vmatprep.subr.mxu0 0.0
    %2250 = vmatpush1.msra.mxu0 0.0
    %2251 = vmatprep.subr.mxu0 0.0
    %2252 = vmatpush1.msra.mxu0 0.0
    %2253 = vmatprep.subr.mxu0 0.0
    %2254 = vmatpush1.msra.mxu0 0.0
    %2255 = vmatprep.subr.mxu0 0.0
    %2256 = vmatpush1.msra.mxu0 0.0
    %2257 = vmatprep.subr.mxu0 0.0
    %2258 = vmatpush1.msra.mxu0 0.0
    %2259 = vmatprep.subr.mxu0 0.0
    %2260 = vmatpush1.msra.mxu0 0.0
    %2261 = vmatprep.subr.mxu0 0.0
    %2262 = vmatpush1.msra.mxu0 0.0
    %2263 = vmatprep.subr.mxu0 0.0
    %2264 = vmatpush1.msra.mxu0 0.0
    %2265 = vmatprep.subr.mxu0 0.0
    %2266 = vmatpush1.msra.mxu0 0.0
    %2267 = vmatprep.subr.mxu0 0.0
    %2268 = vmatpush1.msra.mxu0 0.0
    %2269 = vmatprep.subr.mxu0 0.0
    %2270 = vmatpush1.msra.mxu0 0.0
    %2271 = vmatprep.subr.mxu0 0.0
    %2272 = vmatpush1.msra.mxu0 0.0
    %2273 = vmatprep.subr.mxu0 0.0
    %2274 = vmatpush1.msra.mxu0 0.0
    %2275 = vmatprep.subr.mxu0 0.0
    %2276 = vmatpush1.msra.mxu0 0.0
    %2277 = vmatprep.subr.mxu0 0.0
    %2278 = vmatpush1.msra.mxu0 0.0
    %2279 = vmatprep.subr.mxu0 0.0
    %2280 = vmatpush1.msra.mxu0 0.0
    %2281 = vmatprep.subr.mxu0 0.0
    %2282 = vmatpush1.msra.mxu0 0.0
    %2283 = vmatprep.subr.mxu0 0.0
    %2284 = vmatpush1.msra.mxu0 0.0
    %2285 = vmatprep.subr.mxu0 0.0
    %2286 = vmatpush1.msra.mxu0 0.0
    %2287 = vmatprep.subr.mxu0 0.0
    %2288 = vmatpush1.msra.mxu0 0.0
    %2289 = vmatprep.mubr.f32.mxu0 0.0
    %2290 = vmatmul.mubr.f32.gmra.mrb[0].mxu0 %v869
    %v2291 = vpop.f32.mrb[0].mxu0
    %v2292 = vadd.f32 0.0, %v2291
    %v2293 = vpop.f32.mrb[0].mxu0
    %v2294 = vadd.f32 0.0, %v2293
    %2295 = vdwg.mxu0
    %2296 = vmatprep.subr.mxu0 0.0
    %2297 = vmatpush1.msra.mxu0 %v1907
    %2298 = vmatprep.subr.mxu0 0.0
    %2299 = vmatpush1.msra.mxu0 0.0
    %2300 = vmatprep.subr.mxu0 0.0
    %2301 = vmatpush1.msra.mxu0 0.0
    %2302 = vmatprep.subr.mxu0 0.0
    %2303 = vmatpush1.msra.mxu0 0.0
    %2304 = vmatprep.subr.mxu0 0.0
    %2305 = vmatpush1.msra.mxu0 0.0
    %2306 = vmatprep.subr.mxu0 0.0
    %2307 = vmatpush1.msra.mxu0 0.0
    %2308 = vmatprep.subr.mxu0 0.0
    %2309 = vmatpush1.msra.mxu0 0.0
    %2310 = vmatprep.subr.mxu0 0.0
    %2311 = vmatpush1.msra.mxu0 0.0
    %2312 = vmatprep.subr.mxu0 0.0
    %2313 = vmatpush1.msra.mxu0 0.0
    %2314 = vmatprep.subr.mxu0 0.0
    %2315 = vmatpush1.msra.mxu0 0.0
    %2316 = vmatprep.subr.mxu0 0.0
    %2317 = vmatpush1.msra.mxu0 0.0
    %2318 = vmatprep.subr.mxu0 0.0
    %2319 = vmatpush1.msra.mxu0 0.0
    %2320 = vmatprep.subr.mxu0 0.0
    %2321 = vmatpush1.msra.mxu0 0.0
    %2322 = vmatprep.subr.mxu0 0.0
    %2323 = vmatpush1.msra.mxu0 0.0
    %2324 = vmatprep.subr.mxu0 0.0
    %2325 = vmatpush1.msra.mxu0 0.0
    %2326 = vmatprep.subr.mxu0 0.0
    %2327 = vmatpush1.msra.mxu0 0.0
    %2328 = vmatprep.subr.mxu0 0.0
    %2329 = vmatpush1.msra.mxu0 0.0
    %2330 = vmatprep.subr.mxu0 0.0
    %2331 = vmatpush1.msra.mxu0 0.0
    %2332 = vmatprep.subr.mxu0 0.0
    %2333 = vmatpush1.msra.mxu0 0.0
    %2334 = vmatprep.subr.mxu0 0.0
    %2335 = vmatpush1.msra.mxu0 0.0
    %2336 = vmatprep.subr.mxu0 0.0
    %2337 = vmatpush1.msra.mxu0 0.0
    %2338 = vmatprep.subr.mxu0 0.0
    %2339 = vmatpush1.msra.mxu0 0.0
    %2340 = vmatprep.subr.mxu0 0.0
    %2341 = vmatpush1.msra.mxu0 0.0
    %2342 = vmatprep.subr.mxu0 0.0
    %2343 = vmatpush1.msra.mxu0 0.0
    %2344 = vmatprep.subr.mxu0 0.0
    %2345 = vmatpush1.msra.mxu0 0.0
    %2346 = vmatprep.subr.mxu0 0.0
    %2347 = vmatpush1.msra.mxu0 0.0
    %2348 = vmatprep.subr.mxu0 0.0
    %2349 = vmatpush1.msra.mxu0 0.0
    %2350 = vmatprep.subr.mxu0 0.0
    %2351 = vmatpush1.msra.mxu0 0.0
    %2352 = vmatprep.subr.mxu0 0.0
    %2353 = vmatpush1.msra.mxu0 0.0
    %2354 = vmatprep.subr.mxu0 0.0
    %2355 = vmatpush1.msra.mxu0 0.0
    %2356 = vmatprep.subr.mxu0 0.0
    %2357 = vmatpush1.msra.mxu0 0.0
    %2358 = vmatprep.subr.mxu0 0.0
    %2359 = vmatpush1.msra.mxu0 0.0
    %2360 = vmatprep.mubr.f32.mxu0 0.0
    %2361 = vmatmul.mubr.f32.gmra.mrb[0].mxu0 %v869
    %v2362 = vpop.f32.mrb[0].mxu0
    %v2363 = vadd.f32 0.0, %v2362
    %v2364 = vpop.f32.mrb[0].mxu0
    %2365 = vdwg.mxu0
    %v2366 = vadd.f32 %v2151, %v2292
    %v2367 = vadd.f32 %v2153, %v2294
    %v2368 = vadd.f32 %v2222, %v2363
    %v2371 = vcombine.high %v1421, %v1421
    %v2372 = vsel %vm75, %v1421, 0
    %v2374 = vsel %vm75, %v2371, 0
    %v2376 = vsel %vm75, %v1422, 0
    %2378 = vmatprep.subr.mxu0 %v2374
    %2379 = vmatpush1.msra.mxu0 %v2372
    %2380 = vmatprep.subr.mxu0 0.0
    %2381 = vmatpush1.msra.mxu0 0.0
    %2382 = vmatprep.subr.mxu0 0.0
    %2383 = vmatpush1.msra.mxu0 0.0
    %2384 = vmatprep.subr.mxu0 0.0
    %2385 = vmatpush1.msra.mxu0 0.0
    %2386 = vmatprep.subr.mxu0 0.0
    %2387 = vmatpush1.msra.mxu0 0.0
    %2388 = vmatprep.subr.mxu0 0.0
    %2389 = vmatpush1.msra.mxu0 0.0
    %2390 = vmatprep.subr.mxu0 0.0
    %2391 = vmatpush1.msra.mxu0 0.0
    %2392 = vmatprep.subr.mxu0 0.0
    %2393 = vmatpush1.msra.mxu0 0.0
    %2394 = vmatprep.subr.mxu0 0.0
    %2395 = vmatpush1.msra.mxu0 0.0
    %2396 = vmatprep.subr.mxu0 0.0
    %2397 = vmatpush1.msra.mxu0 0.0
    %2398 = vmatprep.subr.mxu0 0.0
    %2399 = vmatpush1.msra.mxu0 0.0
    %2400 = vmatprep.subr.mxu0 0.0
    %2401 = vmatpush1.msra.mxu0 0.0
    %2402 = vmatprep.subr.mxu0 0.0
    %2403 = vmatpush1.msra.mxu0 0.0
    %2404 = vmatprep.subr.mxu0 0.0
    %2405 = vmatpush1.msra.mxu0 0.0
    %2406 = vmatprep.subr.mxu0 0.0
    %2407 = vmatpush1.msra.mxu0 0.0
    %2408 = vmatprep.subr.mxu0 0.0
    %2409 = vmatpush1.msra.mxu0 0.0
    %2410 = vmatprep.subr.mxu0 0.0
    %2411 = vmatpush1.msra.mxu0 0.0
    %2412 = vmatprep.subr.mxu0 0.0
    %2413 = vmatpush1.msra.mxu0 0.0
    %2414 = vmatprep.subr.mxu0 0.0
    %2415 = vmatpush1.msra.mxu0 0.0
    %2416 = vmatprep.subr.mxu0 0.0
    %2417 = vmatpush1.msra.mxu0 0.0
    %2418 = vmatprep.subr.mxu0 0.0
    %2419 = vmatpush1.msra.mxu0 0.0
    %2420 = vmatprep.subr.mxu0 0.0
    %2421 = vmatpush1.msra.mxu0 0.0
    %2422 = vmatprep.subr.mxu0 0.0
    %2423 = vmatpush1.msra.mxu0 0.0
    %2424 = vmatprep.subr.mxu0 0.0
    %2425 = vmatpush1.msra.mxu0 0.0
    %2426 = vmatprep.subr.mxu0 0.0
    %2427 = vmatpush1.msra.mxu0 0.0
    %2428 = vmatprep.subr.mxu0 0.0
    %2429 = vmatpush1.msra.mxu0 0.0
    %2430 = vmatprep.subr.mxu0 0.0
    %2431 = vmatpush1.msra.mxu0 0.0
    %2432 = vmatprep.subr.mxu0 0.0
    %2433 = vmatpush1.msra.mxu0 0.0
    %2434 = vmatprep.subr.mxu0 0.0
    %2435 = vmatpush1.msra.mxu0 0.0
    %2436 = vmatprep.subr.mxu0 0.0
    %2437 = vmatpush1.msra.mxu0 0.0
    %2438 = vmatprep.subr.mxu0 0.0
    %2439 = vmatpush1.msra.mxu0 0.0
    %2440 = vmatprep.subr.mxu0 0.0
    %2441 = vmatpush1.msra.mxu0 0.0
    %2442 = vmatprep.mubr.f32.mxu0 0.0
    %2443 = vmatmul.mubr.f32.gmra.mrb[0].mxu0 %v1020
    %v2444 = vpop.f32.mrb[0].mxu0
    %v2445 = vadd.f32 0.0, %v2444
    %v2446 = vpop.f32.mrb[0].mxu0
    %v2447 = vadd.f32 0.0, %v2446
    %2448 = vdwg.mxu0
    %2449 = vmatprep.subr.mxu0 0.0
    %2450 = vmatpush1.msra.mxu0 %v2376
    %2451 = vmatprep.subr.mxu0 0.0
    %2452 = vmatpush1.msra.mxu0 0.0
    %2453 = vmatprep.subr.mxu0 0.0
    %2454 = vmatpush1.msra.mxu0 0.0
    %2455 = vmatprep.subr.mxu0 0.0
    %2456 = vmatpush1.msra.mxu0 0.0
    %2457 = vmatprep.subr.mxu0 0.0
    %2458 = vmatpush1.msra.mxu0 0.0
    %2459 = vmatprep.subr.mxu0 0.0
    %2460 = vmatpush1.msra.mxu0 0.0
    %2461 = vmatprep.subr.mxu0 0.0
    %2462 = vmatpush1.msra.mxu0 0.0
    %2463 = vmatprep.subr.mxu0 0.0
    %2464 = vmatpush1.msra.mxu0 0.0
    %2465 = vmatprep.subr.mxu0 0.0
    %2466 = vmatpush1.msra.mxu0 0.0
    %2467 = vmatprep.subr.mxu0 0.0
    %2468 = vmatpush1.msra.mxu0 0.0
    %2469 = vmatprep.subr.mxu0 0.0
    %2470 = vmatpush1.msra.mxu0 0.0
    %2471 = vmatprep.subr.mxu0 0.0
    %2472 = vmatpush1.msra.mxu0 0.0
    %2473 = vmatprep.subr.mxu0 0.0
    %2474 = vmatpush1.msra.mxu0 0.0
    %2475 = vmatprep.subr.mxu0 0.0
    %2476 = vmatpush1.msra.mxu0 0.0
    %2477 = vmatprep.subr.mxu0 0.0
    %2478 = vmatpush1.msra.mxu0 0.0
    %2479 = vmatprep.subr.mxu0 0.0
    %2480 = vmatpush1.msra.mxu0 0.0
    %2481 = vmatprep.subr.mxu0 0.0
    %2482 = vmatpush1.msra.mxu0 0.0
    %2483 = vmatprep.subr.mxu0 0.0
    %2484 = vmatpush1.msra.mxu0 0.0
    %2485 = vmatprep.subr.mxu0 0.0
    %2486 = vmatpush1.msra.mxu0 0.0
    %2487 = vmatprep.subr.mxu0 0.0
    %2488 = vmatpush1.msra.mxu0 0.0
    %2489 = vmatprep.subr.mxu0 0.0
    %2490 = vmatpush1.msra.mxu0 0.0
    %2491 = vmatprep.subr.mxu0 0.0
    %2492 = vmatpush1.msra.mxu0 0.0
    %2493 = vmatprep.subr.mxu0 0.0
    %2494 = vmatpush1.msra.mxu0 0.0
    %2495 = vmatprep.subr.mxu0 0.0
    %2496 = vmatpush1.msra.mxu0 0.0
    %2497 = vmatprep.subr.mxu0 0.0
    %2498 = vmatpush1.msra.mxu0 0.0
    %2499 = vmatprep.subr.mxu0 0.0
    %2500 = vmatpush1.msra.mxu0 0.0
    %2501 = vmatprep.subr.mxu0 0.0
    %2502 = vmatpush1.msra.mxu0 0.0
    %2503 = vmatprep.subr.mxu0 0.0
    %2504 = vmatpush1.msra.mxu0 0.0
    %2505 = vmatprep.subr.mxu0 0.0
    %2506 = vmatpush1.msra.mxu0 0.0
    %2507 = vmatprep.subr.mxu0 0.0
    %2508 = vmatpush1.msra.mxu0 0.0
    %2509 = vmatprep.subr.mxu0 0.0
    %2510 = vmatpush1.msra.mxu0 0.0
    %2511 = vmatprep.subr.mxu0 0.0
    %2512 = vmatpush1.msra.mxu0 0.0
    %2513 = vmatprep.mubr.f32.mxu0 0.0
    %2514 = vmatmul.mubr.f32.gmra.mrb[0].mxu0 %v1020
    %v2515 = vpop.f32.mrb[0].mxu0
    %v2516 = vadd.f32 0.0, %v2515
    %v2517 = vpop.f32.mrb[0].mxu0
    %2518 = vdwg.mxu0
    %v2519 = vadd.f32 %v2366, %v2445
    %v2520 = vadd.f32 %v2367, %v2447
    %v2521 = vadd.f32 %v2368, %v2516
    %v2522 = vadd.f32 %v2519, %v1174
    %v2523 = vadd.f32 %v2520, %v1174
    %v2524 = vadd.f32 %v2521, %v1174
    %v2525 = vtanh.pop %v1905
    %v2526 = vtanh.pop %v1906
    %v2527 = vtanh.pop %v1907
    %v2528 = vxor.u32 %v1905, 2147483648
    %v2529 = vxor.u32 %v1906, 2147483648
    %v2530 = vxor.u32 %v1907, 2147483648
    %v2531 = vmul.f32 %v2528, 1.442695
    %v2532 = vpow.pop %v2531
    %v2533 = vmul.f32 %v2529, 1.442695
    %v2534 = vpow.pop %v2533
    %v2535 = vmul.f32 %v2530, 1.442695
    %v2536 = vpow.pop %v2535
    %v2537 = vadd.f32 %v2532, 1.0
    %v2538 = vadd.f32 %v2534, 1.0
    %v2539 = vadd.f32 %v2536, 1.0
    %v2540 = vrcp.pop %v2537
    %v2541 = vmul.f32 1.0, %v2540
    %v2542 = vrcp.pop %v2538
    %v2543 = vmul.f32 1.0, %v2542
    %v2544 = vrcp.pop %v2539
    %v2545 = vmul.f32 1.0, %v2544
    %v2549 = vrot.slane %v2541, 4
    %v2550 = vrot.slane %v2543, 4
    %v2551 = vrot.slane %v2545, 4
    %v2555 = vmul.f32 %v2525, %v2549
    %v2556 = vmul.f32 %v2526, %v2550
    %v2557 = vmul.f32 %v2527, %v2551
    %v2558 = vtanh.pop %v2522
    %v2559 = vtanh.pop %v2523
    %v2560 = vtanh.pop %v2524
    %v2561 = vxor.u32 %v2522, 2147483648
    %v2562 = vxor.u32 %v2523, 2147483648
    %v2563 = vxor.u32 %v2524, 2147483648
    %v2564 = vmul.f32 %v2561, 1.442695
    %v2565 = vpow.pop %v2564
    %v2566 = vmul.f32 %v2562, 1.442695
    %v2567 = vpow.pop %v2566
    %v2568 = vmul.f32 %v2563, 1.442695
    %v2569 = vpow.pop %v2568
    %v2570 = vadd.f32 %v2565, 1.0
    %v2571 = vadd.f32 %v2567, 1.0
    %v2572 = vadd.f32 %v2569, 1.0
    %v2573 = vrcp.pop %v2570
    %v2574 = vmul.f32 1.0, %v2573
    %v2575 = vrcp.pop %v2571
    %v2576 = vmul.f32 1.0, %v2575
    %v2577 = vrcp.pop %v2572
    %v2578 = vmul.f32 1.0, %v2577
    %v2582 = vrot.slane %v2574, 4
    %v2583 = vrot.slane %v2576, 4
    %v2584 = vrot.slane %v2578, 4
    %v2588 = vmul.f32 %v2558, %v2582
    %v2589 = vmul.f32 %v2559, %v2583
    %v2590 = vmul.f32 %v2560, %v2584
    %v2591 = vld [vmem:[%s5] sm:$0xf]
    %v2596 = vsel %vm71, %v2591, 0
    %v2599 = vsel %vm75, %v2588, 0
    %v2602 = vsel %vm75, %v2589, 0
    %v2605 = vsel %vm75, %v2590, 0
    %2607 = vmatprep.subr.mxu0 %v2602
    %2608 = vmatpush1.msra.mxu0 %v2599
    %2609 = vmatprep.subr.mxu0 0.0
    %2610 = vmatpush1.msra.mxu0 0.0
    %2611 = vmatprep.subr.mxu0 0.0
    %2612 = vmatpush1.msra.mxu0 0.0
    %2613 = vmatprep.subr.mxu0 0.0
    %2614 = vmatpush1.msra.mxu0 0.0
    %2615 = vmatprep.subr.mxu0 0.0
    %2616 = vmatpush1.msra.mxu0 0.0
    %2617 = vmatprep.subr.mxu0 0.0
    %2618 = vmatpush1.msra.mxu0 0.0
    %2619 = vmatprep.subr.mxu0 0.0
    %2620 = vmatpush1.msra.mxu0 0.0
    %2621 = vmatprep.subr.mxu0 0.0
    %2622 = vmatpush1.msra.mxu0 0.0
    %2623 = vmatprep.subr.mxu0 0.0
    %2624 = vmatpush1.msra.mxu0 0.0
    %2625 = vmatprep.subr.mxu0 0.0
    %2626 = vmatpush1.msra.mxu0 0.0
    %2627 = vmatprep.subr.mxu0 0.0
    %2628 = vmatpush1.msra.mxu0 0.0
    %2629 = vmatprep.subr.mxu0 0.0
    %2630 = vmatpush1.msra.mxu0 0.0
    %2631 = vmatprep.subr.mxu0 0.0
    %2632 = vmatpush1.msra.mxu0 0.0
    %2633 = vmatprep.subr.mxu0 0.0
    %2634 = vmatpush1.msra.mxu0 0.0
    %2635 = vmatprep.subr.mxu0 0.0
    %2636 = vmatpush1.msra.mxu0 0.0
    %2637 = vmatprep.subr.mxu0 0.0
    %2638 = vmatpush1.msra.mxu0 0.0
    %2639 = vmatprep.subr.mxu0 0.0
    %2640 = vmatpush1.msra.mxu0 0.0
    %2641 = vmatprep.subr.mxu0 0.0
    %2642 = vmatpush1.msra.mxu0 0.0
    %2643 = vmatprep.subr.mxu0 0.0
    %2644 = vmatpush1.msra.mxu0 0.0
    %2645 = vmatprep.subr.mxu0 0.0
    %2646 = vmatpush1.msra.mxu0 0.0
    %2647 = vmatprep.subr.mxu0 0.0
    %2648 = vmatpush1.msra.mxu0 0.0
    %2649 = vmatprep.subr.mxu0 0.0
    %2650 = vmatpush1.msra.mxu0 0.0
    %2651 = vmatprep.subr.mxu0 0.0
    %2652 = vmatpush1.msra.mxu0 0.0
    %2653 = vmatprep.subr.mxu0 0.0
    %2654 = vmatpush1.msra.mxu0 0.0
    %2655 = vmatprep.subr.mxu0 0.0
    %2656 = vmatpush1.msra.mxu0 0.0
    %2657 = vmatprep.subr.mxu0 0.0
    %2658 = vmatpush1.msra.mxu0 0.0
    %2659 = vmatprep.subr.mxu0 0.0
    %2660 = vmatpush1.msra.mxu0 0.0
    %2661 = vmatprep.subr.mxu0 0.0
    %2662 = vmatpush1.msra.mxu0 0.0
    %2663 = vmatprep.subr.mxu0 0.0
    %2664 = vmatpush1.msra.mxu0 0.0
    %2665 = vmatprep.subr.mxu0 0.0
    %2666 = vmatpush1.msra.mxu0 0.0
    %2667 = vmatprep.subr.mxu0 0.0
    %2668 = vmatpush1.msra.mxu0 0.0
    %2669 = vmatprep.subr.mxu0 0.0
    %2670 = vmatpush1.msra.mxu0 0.0
    %2671 = vmatprep.mubr.f32.mxu0 0.0
    %2672 = vmatmul.mubr.f32.gmra.mrb[0].mxu0 %v2596
    %v2673 = vpop.f32.mrb[0].mxu0
    %v2674 = vadd.f32 %v1922, %v2673
    %v2675 = vpop.f32.mrb[0].mxu0
    %v2676 = vadd.f32 %v1923, %v2675
    %2677 = vdwg.mxu0
    %2678 = vmatprep.subr.mxu0 0.0
    %2679 = vmatpush1.msra.mxu0 %v2605
    %2680 = vmatprep.subr.mxu0 0.0
    %2681 = vmatpush1.msra.mxu0 0.0
    %2682 = vmatprep.subr.mxu0 0.0
    %2683 = vmatpush1.msra.mxu0 0.0
    %2684 = vmatprep.subr.mxu0 0.0
    %2685 = vmatpush1.msra.mxu0 0.0
    %2686 = vmatprep.subr.mxu0 0.0
    %2687 = vmatpush1.msra.mxu0 0.0
    %2688 = vmatprep.subr.mxu0 0.0
    %2689 = vmatpush1.msra.mxu0 0.0
    %2690 = vmatprep.subr.mxu0 0.0
    %2691 = vmatpush1.msra.mxu0 0.0
    %2692 = vmatprep.subr.mxu0 0.0
    %2693 = vmatpush1.msra.mxu0 0.0
    %2694 = vmatprep.subr.mxu0 0.0
    %2695 = vmatpush1.msra.mxu0 0.0
    %2696 = vmatprep.subr.mxu0 0.0
    %2697 = vmatpush1.msra.mxu0 0.0
    %2698 = vmatprep.subr.mxu0 0.0
    %2699 = vmatpush1.msra.mxu0 0.0
    %2700 = vmatprep.subr.mxu0 0.0
    %2701 = vmatpush1.msra.mxu0 0.0
    %2702 = vmatprep.subr.mxu0 0.0
    %2703 = vmatpush1.msra.mxu0 0.0
    %2704 = vmatprep.subr.mxu0 0.0
    %2705 = vmatpush1.msra.mxu0 0.0
    %2706 = vmatprep.subr.mxu0 0.0
    %2707 = vmatpush1.msra.mxu0 0.0
    %2708 = vmatprep.subr.mxu0 0.0
    %2709 = vmatpush1.msra.mxu0 0.0
    %2710 = vmatprep.subr.mxu0 0.0
    %2711 = vmatpush1.msra.mxu0 0.0
    %2712 = vmatprep.subr.mxu0 0.0
    %2713 = vmatpush1.msra.mxu0 0.0
    %2714 = vmatprep.subr.mxu0 0.0
    %2715 = vmatpush1.msra.mxu0 0.0
    %2716 = vmatprep.subr.mxu0 0.0
    %2717 = vmatpush1.msra.mxu0 0.0
    %2718 = vmatprep.subr.mxu0 0.0
    %2719 = vmatpush1.msra.mxu0 0.0
    %2720 = vmatprep.subr.mxu0 0.0
    %2721 = vmatpush1.msra.mxu0 0.0
    %2722 = vmatprep.subr.mxu0 0.0
    %2723 = vmatpush1.msra.mxu0 0.0
    %2724 = vmatprep.subr.mxu0 0.0
    %2725 = vmatpush1.msra.mxu0 0.0
    %2726 = vmatprep.subr.mxu0 0.0
    %2727 = vmatpush1.msra.mxu0 0.0
    %2728 = vmatprep.subr.mxu0 0.0
    %2729 = vmatpush1.msra.mxu0 0.0
    %2730 = vmatprep.subr.mxu0 0.0
    %2731 = vmatpush1.msra.mxu0 0.0
    %2732 = vmatprep.subr.mxu0 0.0
    %2733 = vmatpush1.msra.mxu0 0.0
    %2734 = vmatprep.subr.mxu0 0.0
    %2735 = vmatpush1.msra.mxu0 0.0
    %2736 = vmatprep.subr.mxu0 0.0
    %2737 = vmatpush1.msra.mxu0 0.0
    %2738 = vmatprep.subr.mxu0 0.0
    %2739 = vmatpush1.msra.mxu0 0.0
    %2740 = vmatprep.subr.mxu0 0.0
    %2741 = vmatpush1.msra.mxu0 0.0
    %2742 = vmatprep.mubr.f32.mxu0 0.0
    %2743 = vmatmul.mubr.f32.gmra.mrb[0].mxu0 %v2596
    %v2744 = vpop.f32.mrb[0].mxu0
    %v2745 = vadd.f32 %v1924, %v2744
    %v2746 = vpop.f32.mrb[0].mxu0
    %2747 = vdwg.mxu0
    %v2750 = vcombine.low %v2555, %v2556
    %s2752 = scalar_lea.vmem [#allocation5], 12
    %2753 = vst [vmem:[%s2752] sm:$0xff] %v2750
    %2754 = vst [vmem:[%s2752 + $0x8] sm:$0xf] %v2557
    %v2757 = vcombine.low %v2674, %v2676
    %s2759 = scalar_lea.vmem [#allocation6], 12
    %2760 = vst [vmem:[%s2759] sm:$0xff] %v2757
    %2761 = vst [vmem:[%s2759 + $0x8] sm:$0xf] %v2745
    // Predicated region
    $region34: #{tpu_custom_call.1} parent=1 // pred_check
      _
    $region35: #{tpu_custom_call.1} parent=1 // pred_check_branch
      %2763 = sbr.rel (0) target = $region37
    $region36: #{tpu_custom_call.1} parent=1 // pred_region
      %s2765 = ssub.s32 384, 384
      %2766 = vsyncadd [#allocation4], %s2765
      %s2767 = sshll.u32 [#allocation5], 4
      %s2768 = int_to_ptr.vmem [resolvable:$true] %s2767
      %2773 = dma.vmem_to_hbm [thread:$0]  %s2768, 384, %s7, [#allocation4], 192, 192, 12
    $region37: #{tpu_custom_call.1} parent=1 // pred_fallthru
      _
    // Predicated region
    $region38: #{tpu_custom_call.1} parent=1 // pred_check
      _
    $region39: #{tpu_custom_call.1} parent=1 // pred_check_branch
      %2775 = sbr.rel (0) target = $region41
    $region40: #{tpu_custom_call.1} parent=1 // pred_region
      %s2777 = ssub.s32 384, 384
      %2778 = vsyncadd [#allocation7], %s2777
      %s2779 = sshll.u32 [#allocation6], 4
      %s2780 = int_to_ptr.vmem [resolvable:$true] %s2779
      %2785 = dma.vmem_to_hbm [thread:$0]  %s2780, 384, %s8, [#allocation7], 192, 192, 12
    $region41: #{tpu_custom_call.1} parent=1 // pred_fallthru
      _
    // Predicated region
    $region42: #{tpu_custom_call.1} parent=1 // pred_check
      _
    $region43: #{tpu_custom_call.1} parent=1 // pred_check_branch
      %2787 = sbr.rel (0) target = $region45
    $region44: #{tpu_custom_call.1} parent=1 // pred_region
      %2788 = dma.done [#allocation4], 384
    $region45: #{tpu_custom_call.1} parent=1 // pred_fallthru
      _
    // Predicated region
    $region46: #{tpu_custom_call.1} parent=1 // pred_check
      _
    $region47: #{tpu_custom_call.1} parent=1 // pred_check_branch
      %2790 = sbr.rel (0) target = $region49
    $region48: #{tpu_custom_call.1} parent=1 // pred_region
      %2791 = dma.done [#allocation7], 384
    $region49: #{tpu_custom_call.1} parent=1 // pred_fallthru
      _
    %2792 = vsyncpa [#allocation3], 1
    %2793 = vsyncpa [#allocation4], 1
    %2794 = vsyncpa [#allocation7], 1

</llo_original>
